<compile_context>
chip_gen: v7x
topology: tpu7x:2x2x1
jax: 0.10.0
libtpu: 0.0.40
codegen_flags: <defaults>
</compile_context>

<pallas_src>
import math

import jax
import jax.numpy as jnp
from jax.experimental import pallas as pl
from jax.experimental.pallas import tpu as pltpu


def _round_up(v, m):
    return m * ((v + m - 1) // m)


# ----------------------------------------------------------------------------
# Pallas kernel for DdspGenerator.net
#   input 1x1 conv -> num_layers x ResBlock(conv3 -> gelu -> conv3 -> +res)
#   -> output 1x1 conv -> sigmoid (first dim_periodicity ch) / exp (rest)
# Layout: rows = time frames (sublane axis), cols = channels (lane axis).
# Each grid step sees a window of W = TILE + 2*halo frames of one batch item
# and writes the central TILE frames.
# ----------------------------------------------------------------------------
def _make_net_kernel(num_layers, dim_periodicity, L, tile, halo, c_p,
                     gelu_approx):
    def kernel(x_ref, w_in_ref, b_in_ref, res_w_ref, res_b_ref,
               w_out_ref, b_out_ref, o_ref, taps_ref):
        W = x_ref.shape[0]                      # TILE + 2*halo (multiple of 8)
        j = pl.program_id(1)                    # tile index within this batch
        base = j * tile - halo                  # global frame of window row 0

        # Boundary masks (Conv1d zero padding at frame 0 / L-1 of each batch
        # item).  Computed once per grid step from an iota and broadcast to
        # (W, C) here, reused by every conv3 below (no per-call broadcasts).
        g = jax.lax.broadcasted_iota(jnp.int32, (W, 1), 0) + base
        keep_prev = jnp.broadcast_to((g >= 1).astype(jnp.float32), (W, c_p))
        keep_next = jnp.broadcast_to((g < L - 1).astype(jnp.float32), (W, c_p))

        def conv3(a, idx):
            # Conv1d(C, C, 3, padding=1) as ONE fused K=3C matmul.  The three
            # taps are assembled into the persistent VMEM scratch `taps_ref`
            # (no fresh (W,3C) concat slab per call); row shifts via
            # pltpu.roll on the f32 activation (XLU), boundary zeroing via
            # the hoisted masks.  (On v5e a 3x K=C accumulating split with
            # shifted partial sums would skip this assembly entirely.)
            taps_ref[:, c_p:2 * c_p] = a.astype(jnp.bfloat16)
            taps_ref[:, 0:c_p] = (
                pltpu.roll(a, 1, axis=0) * keep_prev).astype(jnp.bfloat16)
            taps_ref[:, 2 * c_p:3 * c_p] = (
                pltpu.roll(a, W - 1, axis=0) * keep_next).astype(jnp.bfloat16)
            return jnp.dot(taps_ref[...], res_w_ref[idx],
                           preferred_element_type=jnp.float32) + res_b_ref[idx]

        # input_layer: Conv1d(in_channels, channels, 1) == channel matmul.
        h = jnp.dot(x_ref[...], w_in_ref[...],
                    preferred_element_type=jnp.float32) + b_in_ref[...]

        # Residual stack.  Activations / residual path stay f32; bf16 only for
        # MXU operands.  num_layers is small (2-3) so the static unroll gives
        # the scheduler full visibility.
        # TODO(synk): for large num_layers use lax.fori_loop (res_w_ref
        #             supports dynamic first-axis indexing) to bound live ranges.
        for layer in range(num_layers):
            a = conv3(h, 2 * layer)
            # tanh GELU runs on the EUP; gelu_approx=False gives exact erf
            # parity with PyTorch's default F.gelu (sub-1e-3 difference).
            a = jax.nn.gelu(a, approximate=gelu_approx)
            a = conv3(a, 2 * layer + 1)
            h = a + h

        # output_layer on the central TILE rows only (halo rows are redundant
        # from here on).  halo is a multiple of 8 -> aligned sublane slice.
        hc = h[halo:halo + tile, :].astype(jnp.bfloat16)
        out = jnp.dot(hc, w_out_ref[...],
                      preferred_element_type=jnp.float32) + b_out_ref[...]

        # Epilogue: one exp for both branches; sigmoid = ex/(1+ex) via the EUP
        # reciprocal.  Guard the (unlikely) exp overflow so sigmoid -> 1.0 like
        # torch.sigmoid instead of NaN.
        ex = jnp.exp(out)
        sig = ex * pl.reciprocal(1.0 + ex, approx=True)
        sig = jnp.where(out > 20.0, 1.0, sig)
        col = jax.lax.broadcasted_iota(jnp.int32, out.shape, 1)
        o_ref[...] = jnp.where(col < dim_periodicity, sig, ex).astype(o_ref.dtype)

    return kernel


def ddsp_net_pallas(x_ncl, params, num_layers, dim_periodicity, out_channels,
                    tile_rows=None, gelu_approx=True):
    """x_ncl: [B, in_channels, L] (PyTorch NCL layout). Returns (p, e) in NCL (f32)."""
    w_in, b_in, res_w, res_b, w_out, b_out = params
    assert x_ncl.ndim == 3
    B, Cin, L = x_ncl.shape
    assert L >= 1
    Cin_p, C_p = w_in.shape
    Cout_p = w_out.shape[1]

    # --- per-generation tile / VMEM sizing -----------------------------------
    try:
        vmem_cap = pltpu.get_tpu_info().vmem_capacity_bytes
    except Exception:  # pragma: no cover - conservative fallback
        vmem_cap = 64 * 1024 * 1024
    vmem_limit = int(min(vmem_cap * 3 // 4, 96 * 1024 * 1024))
    if tile_rows is None:
        # 512-row MXU-full tiles on 128-MiB parts (v5e/v6e), half on 64-MiB v7x.
        tile_rows = 512 if vmem_cap >= (96 << 20) else 256

    halo = _round_up(max(2 * num_layers, 1), 8)       # conv receptive field, 8-aligned
    TILE = min(tile_rows, _round_up(L, 8))            # multiple of 8
    TPB = pl.cdiv(L, TILE)                            # tiles per batch item
    Lp = TPB * TILE
    W = TILE + 2 * halo                               # window rows per grid step

    # --- build halo'd input windows (small HBM duplication: W/TILE factor) ---
    x = jnp.transpose(x_ncl, (0, 2, 1))                           # (B, L, Cin)
    x = jnp.pad(x, ((0, 0), (0, Lp - L), (0, Cin_p - Cin)))       # (B, Lp, Cin_p)
    x = x.astype(jnp.bfloat16)
    x_ext = jnp.pad(x, ((0, 0), (halo, halo), (0, 0)))            # (B, Lp+2h, Cin_p)
    windows = jnp.stack(
        [x_ext[:, t * TILE: t * TILE + W, :] for t in range(TPB)],
        axis=1)                                                   # (B, TPB, W, Cin_p)

    kernel = _make_net_kernel(num_layers, dim_periodicity, L, TILE, halo, C_p,
                              gelu_approx)
    o = pl.pallas_call(
        kernel,
        out_shape=jax.ShapeDtypeStruct((B, TPB, TILE, Cout_p), jnp.bfloat16),
        grid=(B, TPB),
        in_specs=[
            pl.BlockSpec((None, None, W, Cin_p), lambda b, t: (b, t, 0, 0)),  # x windows
            pl.BlockSpec((Cin_p, C_p), lambda b, t: (0, 0)),                  # w_in
            pl.BlockSpec((1, C_p), lambda b, t: (0, 0)),                      # b_in
            pl.BlockSpec(res_w.shape, lambda b, t: (0, 0, 0)),                # fused conv w
            pl.BlockSpec(res_b.shape, lambda b, t: (0, 0, 0)),                # conv biases
            pl.BlockSpec((C_p, Cout_p), lambda b, t: (0, 0)),                 # w_out
            pl.BlockSpec((1, Cout_p), lambda b, t: (0, 0)),                   # b_out
        ],
        out_specs=pl.BlockSpec((None, None, TILE, Cout_p),
                               lambda b, t: (b, t, 0, 0)),
        scratch_shapes=[pltpu.VMEM((W, 3 * C_p), jnp.bfloat16)],   # shared tap slab
        compiler_params=pltpu.CompilerParams(
            dimension_semantics=("parallel", "parallel"),
            vmem_limit_bytes=vmem_limit),
    )(windows, w_in, b_in, res_w, res_b, w_out, b_out)

    # drop time padding + the padded lanes (only out_channels of 128 are real).
    o = o.reshape(B, Lp, Cout_p)[:, :L, :out_channels].astype(jnp.float32)
    o = jnp.transpose(o, (0, 2, 1))                               # (B, Cout, L)
    p = o[:, :dim_periodicity, :]
    e = o[:, dim_periodicity:, :]
    return p, e


# ----------------------------------------------------------------------------
# Deterministic parameter init (PyTorch Conv1d init), packed for the kernel:
#   * channel dims zero-padded to multiples of 128 (lane-dense layout)
#   * the 3 conv taps fused along the contraction axis -> (3*C_p, C_p)
#   * matmul weights stored in bf16 (MXU-native); biases kept in f32
# ----------------------------------------------------------------------------
def init_params(key, in_channels, channels, num_layers, out_channels):
    Cin_p = _round_up(in_channels, 128)
    C_p = _round_up(channels, 128)
    Cout_p = _round_up(out_channels, 128)

    keys = list(jax.random.split(key, 4 + 4 * num_layers))

    def conv_w(k, cout, cin, ks):
        bound = 1.0 / math.sqrt(cin * ks)
        return jax.random.uniform(k, (cout, cin, ks), jnp.float32, -bound, bound)

    def conv_b(k, cout, cin, ks):
        bound = 1.0 / math.sqrt(cin * ks)
        return jax.random.uniform(k, (cout,), jnp.float32, -bound, bound)

    # input_layer: Conv1d(in_channels, channels, 1)
    w_in_pt = conv_w(keys.pop(), channels, in_channels, 1)
    b_in_pt = conv_b(keys.pop(), channels, in_channels, 1)

    # ResBlocks: two Conv1d(channels, channels, 3, padding=1) each
    res_w_list, res_b_list = [], []
    for _ in range(num_layers):
        for _conv in range(2):
            w = conv_w(keys.pop(), channels, channels, 3)
            b = conv_b(keys.pop(), channels, channels, 3)
            blocks = []
            for k in range(3):                      # tap order: t-1, t, t+1
                wk = jnp.zeros((C_p, C_p), jnp.float32)
                wk = wk.at[:channels, :channels].set(w[:, :, k].T)
                blocks.append(wk)
            res_w_list.append(jnp.concatenate(blocks, axis=0))   # (3*C_p, C_p)
            res_b_list.append(
                jnp.zeros((1, C_p), jnp.float32).at[0, :channels].set(b))

    # output_layer: Conv1d(channels, out_channels, 1)
    w_out_pt = conv_w(keys.pop(), out_channels, channels, 1)
    b_out_pt = conv_b(keys.pop(), out_channels, channels, 1)

    w_in = jnp.zeros((Cin_p, C_p), jnp.float32)
    w_in = w_in.at[:in_channels, :channels].set(w_in_pt[:, :, 0].T)
    b_in = jnp.zeros((1, C_p), jnp.float32).at[0, :channels].set(b_in_pt)
    res_w = jnp.stack(res_w_list, axis=0)           # (2*NL, 3*C_p, C_p)
    res_b = jnp.stack(res_b_list, axis=0)           # (2*NL, 1, C_p)
    w_out = jnp.zeros((C_p, Cout_p), jnp.float32)
    w_out = w_out.at[:channels, :out_channels].set(w_out_pt[:, :, 0].T)
    b_out = jnp.zeros((1, Cout_p), jnp.float32).at[0, :out_channels].set(b_out_pt)

    return (w_in.astype(jnp.bfloat16), b_in,
            res_w.astype(jnp.bfloat16), res_b,
            w_out.astype(jnp.bfloat16), b_out)


# ----------------------------------------------------------------------------
# SubtractiveVocoder (simplified).
# TODO(synk): exact tts_impl SubtractiveVocoder (mel->linear filtering + ISTFT)
# source was not provided; a simplified harmonic+noise synthesis is used here
# in plain JAX, keeping the same (f0, periodicity, envelope) -> waveform API.
# ----------------------------------------------------------------------------
def subtractive_vocoder(f0, p, e, sample_rate, hop_length, noise_key):
    # f0: [B, L], p: [B, dim_periodicity, L] in (0,1), e: [B, n_mels, L] > 0
    B, L = f0.shape
    T = L * hop_length
    f0_up = jnp.repeat(f0, hop_length, axis=-1)              # [B, T]
    phase = 2.0 * jnp.pi * jnp.cumsum(f0_up / sample_rate, axis=-1)
    harmonic = jnp.sin(phase)
    per_up = jnp.repeat(jnp.mean(p, axis=1), hop_length, axis=-1)
    amp_up = jnp.repeat(jnp.mean(e, axis=1), hop_length, axis=-1)
    noise = jax.random.normal(noise_key, (B, T), jnp.float32)
    voiced = (f0_up > 0.0).astype(jnp.float32)
    wav = (harmonic * per_up * voiced + noise * (1.0 - per_up)) * amp_up
    return wav                                               # [B, T]


# ----------------------------------------------------------------------------
# DdspGenerator.forward
# ----------------------------------------------------------------------------
def ddsp_generator_forward(x, f0, params, *, num_layers, dim_periodicity,
                           n_mels, sample_rate, hop_length, noise_key,
                           uv=None, tile_rows=None, gelu_approx=True):
    out_channels = dim_periodicity + n_mels
    p, e = ddsp_net_pallas(x, params, num_layers, dim_periodicity, out_channels,
                           tile_rows=tile_rows, gelu_approx=gelu_approx)
    wav = subtractive_vocoder(f0, p, e, sample_rate, hop_length, noise_key)
    return wav[:, None, :]                                   # unsqueeze(dim=1)


if __name__ == "__main__":
    key = jax.random.PRNGKey(0)
    # small shapes consistent with the module
    B, in_channels, L = 2, 16, 16
    channels, num_layers = 64, 2
    dim_periodicity, n_mels = 4, 12
    sample_rate, hop_length = 8000, 32
    out_channels = n_mels + dim_periodicity

    k_param, k_x, k_f0, k_noise = jax.random.split(key, 4)
    params = init_params(k_param, in_channels, channels, num_layers, out_channels)

    x = jax.random.normal(k_x, (B, in_channels, L), jnp.float32)   # mel frames (NCL)
    f0 = 100.0 + 200.0 * jax.random.uniform(k_f0, (B, L), jnp.float32)

    out = ddsp_generator_forward(
        x, f0, params,
        num_layers=num_layers, dim_periodicity=dim_periodicity, n_mels=n_mels,
        sample_rate=sample_rate, hop_length=hop_length, noise_key=k_noise)
    out = jax.block_until_ready(out)

    assert out.shape == (B, 1, L * hop_length), out.shape
    assert bool(jnp.all(jnp.isfinite(out)))
    print("KERNEL_OK")
</pallas_src>

<mosaic_0001>
module attributes {stable_mosaic.version = 11 : i64} {
  func.func @kernel(%arg0: i32, %arg1: i32, %arg2: memref<1x1x32x128xbf16, #tpu.memory_space<vmem>>, %arg3: memref<128x128xbf16, #tpu.memory_space<vmem>>, %arg4: memref<1x128xf32, #tpu.memory_space<vmem>>, %arg5: memref<4x384x128xbf16, #tpu.memory_space<vmem>>, %arg6: memref<4x1x128xf32, #tpu.memory_space<vmem>>, %arg7: memref<128x128xbf16, #tpu.memory_space<vmem>>, %arg8: memref<1x128xf32, #tpu.memory_space<vmem>>, %arg9: memref<1x1x16x128xbf16, #tpu.memory_space<vmem>>, %arg10: memref<32x384xbf16, #tpu.memory_space<vmem>>) attributes {dimension_semantics = [#tpu.dimension_semantics<parallel>, #tpu.dimension_semantics<parallel>], iteration_bounds = array<i64: 2, 1>, scalar_prefetch = 0 : i64, scratch_operands = 1 : i64, tpu.core_type = #tpu.core_type<tc>, window_params = [{transform_indices = @transform_0, window_bounds = array<i64: 1, 1, 32, 128>}, {pipeline_mode = #tpu.pipeline_mode<synchronous>, transform_indices = @transform_1, window_bounds = array<i64: 128, 128>}, {pipeline_mode = #tpu.pipeline_mode<synchronous>, transform_indices = @transform_2, window_bounds = array<i64: 1, 128>}, {pipeline_mode = #tpu.pipeline_mode<synchronous>, transform_indices = @transform_3, window_bounds = array<i64: 4, 384, 128>}, {pipeline_mode = #tpu.pipeline_mode<synchronous>, transform_indices = @transform_4, window_bounds = array<i64: 4, 1, 128>}, {pipeline_mode = #tpu.pipeline_mode<synchronous>, transform_indices = @transform_5, window_bounds = array<i64: 128, 128>}, {pipeline_mode = #tpu.pipeline_mode<synchronous>, transform_indices = @transform_6, window_bounds = array<i64: 1, 128>}, {transform_indices = @transform_7, window_bounds = array<i64: 1, 1, 16, 128>}]} {
    %c16_i32 = arith.constant 16 : i32
    %0 = arith.muli %arg1, %c16_i32 : i32
    %c8_i32 = arith.constant 8 : i32
    %1 = arith.subi %0, %c8_i32 : i32
    %2 = tpu.iota {dimensions = array<i32: 0>} : vector<32x1xi32>
    %3 = vector.broadcast %1 : i32 to vector<32x1xi32>
    %4 = arith.addi %2, %3 : vector<32x1xi32>
    %c1_i32 = arith.constant 1 : i32
    %5 = vector.broadcast %c1_i32 : i32 to vector<32x1xi32>
    %6 = arith.cmpi sge, %4, %5 : vector<32x1xi32>
    %7 = arith.extui %6 : vector<32x1xi1> to vector<32x1xi32>
    %8 = arith.sitofp %7 : vector<32x1xi32> to vector<32x1xf32>
    %9 = vector.shape_cast %8 : vector<32x1xf32> to vector<32x1xf32>
    %10 = vector.broadcast %9 : vector<32x1xf32> to vector<32x128xf32>
    %c15_i32 = arith.constant 15 : i32
    %11 = vector.broadcast %c15_i32 : i32 to vector<32x1xi32>
    %12 = arith.cmpi slt, %4, %11 : vector<32x1xi32>
    %13 = arith.extui %12 : vector<32x1xi1> to vector<32x1xi32>
    %14 = arith.sitofp %13 : vector<32x1xi32> to vector<32x1xf32>
    %15 = vector.shape_cast %14 : vector<32x1xf32> to vector<32x1xf32>
    %16 = vector.broadcast %15 : vector<32x1xf32> to vector<32x128xf32>
    %c0 = arith.constant 0 : index
    %c0_0 = arith.constant 0 : index
    %c0_1 = arith.constant 0 : index
    %c0_2 = arith.constant 0 : index
    %17 = vector.load %arg2[%c0, %c0_0, %c0_1, %c0_2] : memref<1x1x32x128xbf16, #tpu.memory_space<vmem>>, vector<1x1x32x128xbf16>
    %18 = vector.shape_cast %17 : vector<1x1x32x128xbf16> to vector<32x128xbf16>
    %c0_3 = arith.constant 0 : index
    %c0_4 = arith.constant 0 : index
    %19 = vector.load %arg3[%c0_3, %c0_4] : memref<128x128xbf16, #tpu.memory_space<vmem>>, vector<128x128xbf16>
    %cst = arith.constant dense<0.000000e+00> : vector<32x128xf32>
    %20 = tpu.matmul %18, %19, %cst {dimension_numbers = #tpu.dot_dimension_numbers<[1], [0], [0], [1], [0, 0, 1, 1], [], []>} : vector<32x128xbf16>, vector<128x128xbf16>, vector<32x128xf32> -> vector<32x128xf32>
    %c0_5 = arith.constant 0 : index
    %c0_6 = arith.constant 0 : index
    %21 = vector.load %arg4[%c0_5, %c0_6] : memref<1x128xf32, #tpu.memory_space<vmem>>, vector<1x128xf32>
    %22 = vector.broadcast %21 : vector<1x128xf32> to vector<32x128xf32>
    %23 = arith.addf %20, %22 : vector<32x128xf32>
    %24 = arith.truncf %23 : vector<32x128xf32> to vector<32x128xbf16>
    %c0_7 = arith.constant 0 : index
    %c128 = arith.constant 128 : index
    %25 = vector.load %arg10[%c0_7, %c128] : memref<32x384xbf16, #tpu.memory_space<vmem>>, vector<32x128xbf16>
    tpu.vector_store %arg10[%c0_7, %c128], %24 {strides = array<i32>} : memref<32x384xbf16, #tpu.memory_space<vmem>>, vector<32x128xbf16>,
    %c1_i32_8 = arith.constant 1 : i32
    %26 = tpu.dynamic_rotate %23 by %c1_i32_8 dim 0 : vector<32x128xf32>, i32 -> vector<32x128xf32>
    %27 = arith.mulf %26, %10 : vector<32x128xf32>
    %28 = arith.truncf %27 : vector<32x128xf32> to vector<32x128xbf16>
    %c0_9 = arith.constant 0 : index
    %c0_10 = arith.constant 0 : index
    %29 = vector.load %arg10[%c0_9, %c0_10] : memref<32x384xbf16, #tpu.memory_space<vmem>>, vector<32x128xbf16>
    tpu.vector_store %arg10[%c0_9, %c0_10], %28 {strides = array<i32>} : memref<32x384xbf16, #tpu.memory_space<vmem>>, vector<32x128xbf16>,
    %c31_i32 = arith.constant 31 : i32
    %30 = tpu.dynamic_rotate %23 by %c31_i32 dim 0 : vector<32x128xf32>, i32 -> vector<32x128xf32>
    %31 = arith.mulf %30, %16 : vector<32x128xf32>
    %32 = arith.truncf %31 : vector<32x128xf32> to vector<32x128xbf16>
    %c0_11 = arith.constant 0 : index
    %c256 = arith.constant 256 : index
    %33 = vector.load %arg10[%c0_11, %c256] : memref<32x384xbf16, #tpu.memory_space<vmem>>, vector<32x128xbf16>
    tpu.vector_store %arg10[%c0_11, %c256], %32 {strides = array<i32>} : memref<32x384xbf16, #tpu.memory_space<vmem>>, vector<32x128xbf16>,
    %c0_12 = arith.constant 0 : index
    %c0_13 = arith.constant 0 : index
    %34 = vector.load %arg10[%c0_12, %c0_13] : memref<32x384xbf16, #tpu.memory_space<vmem>>, vector<32x384xbf16>
    %c0_14 = arith.constant 0 : index
    %c0_15 = arith.constant 0 : index
    %c0_16 = arith.constant 0 : index
    %35 = vector.load %arg5[%c0_14, %c0_15, %c0_16] : memref<4x384x128xbf16, #tpu.memory_space<vmem>>, vector<1x384x128xbf16>
    %36 = vector.shape_cast %35 : vector<1x384x128xbf16> to vector<384x128xbf16>
    %cst_17 = arith.constant dense<0.000000e+00> : vector<32x128xf32>
    %37 = tpu.matmul %34, %36, %cst_17 {dimension_numbers = #tpu.dot_dimension_numbers<[1], [0], [0], [1], [0, 0, 1, 1], [], []>} : vector<32x384xbf16>, vector<384x128xbf16>, vector<32x128xf32> -> vector<32x128xf32>
    %c0_18 = arith.constant 0 : index
    %c0_19 = arith.constant 0 : index
    %c0_20 = arith.constant 0 : index
    %38 = vector.load %arg6[%c0_18, %c0_19, %c0_20] : memref<4x1x128xf32, #tpu.memory_space<vmem>>, vector<1x1x128xf32>
    %39 = vector.shape_cast %38 : vector<1x1x128xf32> to vector<1x128xf32>
    %40 = vector.broadcast %39 : vector<1x128xf32> to vector<32x128xf32>
    %41 = arith.addf %37, %40 : vector<32x128xf32>
    %42 = arith.mulf %41, %41 : vector<32x128xf32>
    %43 = arith.mulf %41, %42 : vector<32x128xf32>
    %cst_21 = arith.constant 4.471500e-02 : f32
    %44 = vector.broadcast %cst_21 : f32 to vector<32x128xf32>
    %45 = arith.mulf %44, %43 : vector<32x128xf32>
    %46 = arith.addf %41, %45 : vector<32x128xf32>
    %cst_22 = arith.constant 0.797884583 : f32
    %47 = vector.broadcast %cst_22 : f32 to vector<32x128xf32>
    %48 = arith.mulf %47, %46 : vector<32x128xf32>
    %49 = math.tanh %48 : vector<32x128xf32>
    %cst_23 = arith.constant 1.000000e+00 : f32
    %50 = vector.broadcast %cst_23 : f32 to vector<32x128xf32>
    %51 = arith.addf %50, %49 : vector<32x128xf32>
    %cst_24 = arith.constant 5.000000e-01 : f32
    %52 = vector.broadcast %cst_24 : f32 to vector<32x128xf32>
    %53 = arith.mulf %52, %51 : vector<32x128xf32>
    %54 = arith.mulf %41, %53 : vector<32x128xf32>
    %55 = arith.truncf %54 : vector<32x128xf32> to vector<32x128xbf16>
    %c0_25 = arith.constant 0 : index
    %c128_26 = arith.constant 128 : index
    %56 = vector.load %arg10[%c0_25, %c128_26] : memref<32x384xbf16, #tpu.memory_space<vmem>>, vector<32x128xbf16>
    tpu.vector_store %arg10[%c0_25, %c128_26], %55 {strides = array<i32>} : memref<32x384xbf16, #tpu.memory_space<vmem>>, vector<32x128xbf16>,
    %c1_i32_27 = arith.constant 1 : i32
    %57 = tpu.dynamic_rotate %54 by %c1_i32_27 dim 0 : vector<32x128xf32>, i32 -> vector<32x128xf32>
    %58 = arith.mulf %57, %10 : vector<32x128xf32>
    %59 = arith.truncf %58 : vector<32x128xf32> to vector<32x128xbf16>
    %c0_28 = arith.constant 0 : index
    %c0_29 = arith.constant 0 : index
    %60 = vector.load %arg10[%c0_28, %c0_29] : memref<32x384xbf16, #tpu.memory_space<vmem>>, vector<32x128xbf16>
    tpu.vector_store %arg10[%c0_28, %c0_29], %59 {strides = array<i32>} : memref<32x384xbf16, #tpu.memory_space<vmem>>, vector<32x128xbf16>,
    %c31_i32_30 = arith.constant 31 : i32
    %61 = tpu.dynamic_rotate %54 by %c31_i32_30 dim 0 : vector<32x128xf32>, i32 -> vector<32x128xf32>
    %62 = arith.mulf %61, %16 : vector<32x128xf32>
    %63 = arith.truncf %62 : vector<32x128xf32> to vector<32x128xbf16>
    %c0_31 = arith.constant 0 : index
    %c256_32 = arith.constant 256 : index
    %64 = vector.load %arg10[%c0_31, %c256_32] : memref<32x384xbf16, #tpu.memory_space<vmem>>, vector<32x128xbf16>
    tpu.vector_store %arg10[%c0_31, %c256_32], %63 {strides = array<i32>} : memref<32x384xbf16, #tpu.memory_space<vmem>>, vector<32x128xbf16>,
    %c0_33 = arith.constant 0 : index
    %c0_34 = arith.constant 0 : index
    %65 = vector.load %arg10[%c0_33, %c0_34] : memref<32x384xbf16, #tpu.memory_space<vmem>>, vector<32x384xbf16>
    %c1 = arith.constant 1 : index
    %c0_35 = arith.constant 0 : index
    %c0_36 = arith.constant 0 : index
    %66 = vector.load %arg5[%c1, %c0_35, %c0_36] : memref<4x384x128xbf16, #tpu.memory_space<vmem>>, vector<1x384x128xbf16>
    %67 = vector.shape_cast %66 : vector<1x384x128xbf16> to vector<384x128xbf16>
    %cst_37 = arith.constant dense<0.000000e+00> : vector<32x128xf32>
    %68 = tpu.matmul %65, %67, %cst_37 {dimension_numbers = #tpu.dot_dimension_numbers<[1], [0], [0], [1], [0, 0, 1, 1], [], []>} : vector<32x384xbf16>, vector<384x128xbf16>, vector<32x128xf32> -> vector<32x128xf32>
    %c1_38 = arith.constant 1 : index
    %c0_39 = arith.constant 0 : index
    %c0_40 = arith.constant 0 : index
    %69 = vector.load %arg6[%c1_38, %c0_39, %c0_40] : memref<4x1x128xf32, #tpu.memory_space<vmem>>, vector<1x1x128xf32>
    %70 = vector.shape_cast %69 : vector<1x1x128xf32> to vector<1x128xf32>
    %71 = vector.broadcast %70 : vector<1x128xf32> to vector<32x128xf32>
    %72 = arith.addf %68, %71 : vector<32x128xf32>
    %73 = arith.addf %72, %23 : vector<32x128xf32>
    %74 = arith.truncf %73 : vector<32x128xf32> to vector<32x128xbf16>
    %c0_41 = arith.constant 0 : index
    %c128_42 = arith.constant 128 : index
    %75 = vector.load %arg10[%c0_41, %c128_42] : memref<32x384xbf16, #tpu.memory_space<vmem>>, vector<32x128xbf16>
    tpu.vector_store %arg10[%c0_41, %c128_42], %74 {strides = array<i32>} : memref<32x384xbf16, #tpu.memory_space<vmem>>, vector<32x128xbf16>,
    %c1_i32_43 = arith.constant 1 : i32
    %76 = tpu.dynamic_rotate %73 by %c1_i32_43 dim 0 : vector<32x128xf32>, i32 -> vector<32x128xf32>
    %77 = arith.mulf %76, %10 : vector<32x128xf32>
    %78 = arith.truncf %77 : vector<32x128xf32> to vector<32x128xbf16>
    %c0_44 = arith.constant 0 : index
    %c0_45 = arith.constant 0 : index
    %79 = vector.load %arg10[%c0_44, %c0_45] : memref<32x384xbf16, #tpu.memory_space<vmem>>, vector<32x128xbf16>
    tpu.vector_store %arg10[%c0_44, %c0_45], %78 {strides = array<i32>} : memref<32x384xbf16, #tpu.memory_space<vmem>>, vector<32x128xbf16>,
    %c31_i32_46 = arith.constant 31 : i32
    %80 = tpu.dynamic_rotate %73 by %c31_i32_46 dim 0 : vector<32x128xf32>, i32 -> vector<32x128xf32>
    %81 = arith.mulf %80, %16 : vector<32x128xf32>
    %82 = arith.truncf %81 : vector<32x128xf32> to vector<32x128xbf16>
    %c0_47 = arith.constant 0 : index
    %c256_48 = arith.constant 256 : index
    %83 = vector.load %arg10[%c0_47, %c256_48] : memref<32x384xbf16, #tpu.memory_space<vmem>>, vector<32x128xbf16>
    tpu.vector_store %arg10[%c0_47, %c256_48], %82 {strides = array<i32>} : memref<32x384xbf16, #tpu.memory_space<vmem>>, vector<32x128xbf16>,
    %c0_49 = arith.constant 0 : index
    %c0_50 = arith.constant 0 : index
    %84 = vector.load %arg10[%c0_49, %c0_50] : memref<32x384xbf16, #tpu.memory_space<vmem>>, vector<32x384xbf16>
    %c2 = arith.constant 2 : index
    %c0_51 = arith.constant 0 : index
    %c0_52 = arith.constant 0 : index
    %85 = vector.load %arg5[%c2, %c0_51, %c0_52] : memref<4x384x128xbf16, #tpu.memory_space<vmem>>, vector<1x384x128xbf16>
    %86 = vector.shape_cast %85 : vector<1x384x128xbf16> to vector<384x128xbf16>
    %cst_53 = arith.constant dense<0.000000e+00> : vector<32x128xf32>
    %87 = tpu.matmul %84, %86, %cst_53 {dimension_numbers = #tpu.dot_dimension_numbers<[1], [0], [0], [1], [0, 0, 1, 1], [], []>} : vector<32x384xbf16>, vector<384x128xbf16>, vector<32x128xf32> -> vector<32x128xf32>
    %c2_54 = arith.constant 2 : index
    %c0_55 = arith.constant 0 : index
    %c0_56 = arith.constant 0 : index
    %88 = vector.load %arg6[%c2_54, %c0_55, %c0_56] : memref<4x1x128xf32, #tpu.memory_space<vmem>>, vector<1x1x128xf32>
    %89 = vector.shape_cast %88 : vector<1x1x128xf32> to vector<1x128xf32>
    %90 = vector.broadcast %89 : vector<1x128xf32> to vector<32x128xf32>
    %91 = arith.addf %87, %90 : vector<32x128xf32>
    %92 = arith.mulf %91, %91 : vector<32x128xf32>
    %93 = arith.mulf %91, %92 : vector<32x128xf32>
    %cst_57 = arith.constant 4.471500e-02 : f32
    %94 = vector.broadcast %cst_57 : f32 to vector<32x128xf32>
    %95 = arith.mulf %94, %93 : vector<32x128xf32>
    %96 = arith.addf %91, %95 : vector<32x128xf32>
    %cst_58 = arith.constant 0.797884583 : f32
    %97 = vector.broadcast %cst_58 : f32 to vector<32x128xf32>
    %98 = arith.mulf %97, %96 : vector<32x128xf32>
    %99 = math.tanh %98 : vector<32x128xf32>
    %cst_59 = arith.constant 1.000000e+00 : f32
    %100 = vector.broadcast %cst_59 : f32 to vector<32x128xf32>
    %101 = arith.addf %100, %99 : vector<32x128xf32>
    %cst_60 = arith.constant 5.000000e-01 : f32
    %102 = vector.broadcast %cst_60 : f32 to vector<32x128xf32>
    %103 = arith.mulf %102, %101 : vector<32x128xf32>
    %104 = arith.mulf %91, %103 : vector<32x128xf32>
    %105 = arith.truncf %104 : vector<32x128xf32> to vector<32x128xbf16>
    %c0_61 = arith.constant 0 : index
    %c128_62 = arith.constant 128 : index
    %106 = vector.load %arg10[%c0_61, %c128_62] : memref<32x384xbf16, #tpu.memory_space<vmem>>, vector<32x128xbf16>
    tpu.vector_store %arg10[%c0_61, %c128_62], %105 {strides = array<i32>} : memref<32x384xbf16, #tpu.memory_space<vmem>>, vector<32x128xbf16>,
    %c1_i32_63 = arith.constant 1 : i32
    %107 = tpu.dynamic_rotate %104 by %c1_i32_63 dim 0 : vector<32x128xf32>, i32 -> vector<32x128xf32>
    %108 = arith.mulf %107, %10 : vector<32x128xf32>
    %109 = arith.truncf %108 : vector<32x128xf32> to vector<32x128xbf16>
    %c0_64 = arith.constant 0 : index
    %c0_65 = arith.constant 0 : index
    %110 = vector.load %arg10[%c0_64, %c0_65] : memref<32x384xbf16, #tpu.memory_space<vmem>>, vector<32x128xbf16>
    tpu.vector_store %arg10[%c0_64, %c0_65], %109 {strides = array<i32>} : memref<32x384xbf16, #tpu.memory_space<vmem>>, vector<32x128xbf16>,
    %c31_i32_66 = arith.constant 31 : i32
    %111 = tpu.dynamic_rotate %104 by %c31_i32_66 dim 0 : vector<32x128xf32>, i32 -> vector<32x128xf32>
    %112 = arith.mulf %111, %16 : vector<32x128xf32>
    %113 = arith.truncf %112 : vector<32x128xf32> to vector<32x128xbf16>
    %c0_67 = arith.constant 0 : index
    %c256_68 = arith.constant 256 : index
    %114 = vector.load %arg10[%c0_67, %c256_68] : memref<32x384xbf16, #tpu.memory_space<vmem>>, vector<32x128xbf16>
    tpu.vector_store %arg10[%c0_67, %c256_68], %113 {strides = array<i32>} : memref<32x384xbf16, #tpu.memory_space<vmem>>, vector<32x128xbf16>,
    %c0_69 = arith.constant 0 : index
    %c0_70 = arith.constant 0 : index
    %115 = vector.load %arg10[%c0_69, %c0_70] : memref<32x384xbf16, #tpu.memory_space<vmem>>, vector<32x384xbf16>
    %c3 = arith.constant 3 : index
    %c0_71 = arith.constant 0 : index
    %c0_72 = arith.constant 0 : index
    %116 = vector.load %arg5[%c3, %c0_71, %c0_72] : memref<4x384x128xbf16, #tpu.memory_space<vmem>>, vector<1x384x128xbf16>
    %117 = vector.shape_cast %116 : vector<1x384x128xbf16> to vector<384x128xbf16>
    %cst_73 = arith.constant dense<0.000000e+00> : vector<32x128xf32>
    %118 = tpu.matmul %115, %117, %cst_73 {dimension_numbers = #tpu.dot_dimension_numbers<[1], [0], [0], [1], [0, 0, 1, 1], [], []>} : vector<32x384xbf16>, vector<384x128xbf16>, vector<32x128xf32> -> vector<32x128xf32>
    %c3_74 = arith.constant 3 : index
    %c0_75 = arith.constant 0 : index
    %c0_76 = arith.constant 0 : index
    %119 = vector.load %arg6[%c3_74, %c0_75, %c0_76] : memref<4x1x128xf32, #tpu.memory_space<vmem>>, vector<1x1x128xf32>
    %120 = vector.shape_cast %119 : vector<1x1x128xf32> to vector<1x128xf32>
    %121 = vector.broadcast %120 : vector<1x128xf32> to vector<32x128xf32>
    %122 = arith.addf %118, %121 : vector<32x128xf32>
    %123 = arith.addf %122, %73 : vector<32x128xf32>
    %124 = vector.extract_strided_slice %123 {offsets = [8, 0], sizes = [16, 128], strides = [1, 1]} : vector<32x128xf32> to vector<16x128xf32>
    %125 = arith.truncf %124 : vector<16x128xf32> to vector<16x128xbf16>
    %c0_77 = arith.constant 0 : index
    %c0_78 = arith.constant 0 : index
    %126 = vector.load %arg7[%c0_77, %c0_78] : memref<128x128xbf16, #tpu.memory_space<vmem>>, vector<128x128xbf16>
    %cst_79 = arith.constant dense<0.000000e+00> : vector<16x128xf32>
    %127 = tpu.matmul %125, %126, %cst_79 {dimension_numbers = #tpu.dot_dimension_numbers<[1], [0], [0], [1], [0, 0, 1, 1], [], []>} : vector<16x128xbf16>, vector<128x128xbf16>, vector<16x128xf32> -> vector<16x128xf32>
    %c0_80 = arith.constant 0 : index
    %c0_81 = arith.constant 0 : index
    %128 = vector.load %arg8[%c0_80, %c0_81] : memref<1x128xf32, #tpu.memory_space<vmem>>, vector<1x128xf32>
    %129 = vector.broadcast %128 : vector<1x128xf32> to vector<16x128xf32>
    %130 = arith.addf %127, %129 : vector<16x128xf32>
    %131 = math.exp %130 : vector<16x128xf32>
    %cst_82 = arith.constant 1.000000e+00 : f32
    %132 = vector.broadcast %cst_82 : f32 to vector<16x128xf32>
    %133 = arith.addf %132, %131 : vector<16x128xf32>
    %134 = tpu.reciprocal %133 {approx = true} : vector<16x128xf32> -> vector<16x128xf32>
    %135 = arith.mulf %131, %134 : vector<16x128xf32>
    %cst_83 = arith.constant 2.000000e+01 : f32
    %136 = vector.broadcast %cst_83 : f32 to vector<16x128xf32>
    %137 = arith.cmpf ogt, %130, %136 : vector<16x128xf32>
    %cst_84 = arith.constant 1.000000e+00 : f32
    %138 = vector.broadcast %cst_84 : f32 to vector<16x128xf32>
    %139 = arith.select %137, %138, %135 : vector<16x128xi1>, vector<16x128xf32>
    %140 = tpu.iota {dimensions = array<i32: 1>} : vector<16x128xi32>
    %c4_i32 = arith.constant 4 : i32
    %141 = vector.broadcast %c4_i32 : i32 to vector<16x128xi32>
    %142 = arith.cmpi slt, %140, %141 : vector<16x128xi32>
    %143 = arith.select %142, %139, %131 : vector<16x128xi1>, vector<16x128xf32>
    %144 = arith.truncf %143 : vector<16x128xf32> to vector<16x128xbf16>
    %c0_85 = arith.constant 0 : index
    %c0_86 = arith.constant 0 : index
    %c0_87 = arith.constant 0 : index
    %c0_88 = arith.constant 0 : index
    %145 = vector.load %arg9[%c0_85, %c0_86, %c0_87, %c0_88] : memref<1x1x16x128xbf16, #tpu.memory_space<vmem>>, vector<1x1x16x128xbf16>
    %146 = vector.shape_cast %145 : vector<1x1x16x128xbf16> to vector<16x128xbf16>
    %147 = vector.shape_cast %144 : vector<16x128xbf16> to vector<1x1x16x128xbf16>
    tpu.vector_store %arg9[%c0_85, %c0_86, %c0_87, %c0_88], %147 {strides = array<i32>} : memref<1x1x16x128xbf16, #tpu.memory_space<vmem>>, vector<1x1x16x128xbf16>,
    return
  }
  func.func @transform_0(%arg0: i32, %arg1: i32) -> (i32, i32, i32, i32) {
    %c0_i32 = arith.constant 0 : i32
    %c0_i32_0 = arith.constant 0 : i32
    %c0_i32_1 = arith.constant 0 : i32
    return %arg0, %arg1, %c0_i32, %c0_i32_0 : i32, i32, i32, i32
  }
  func.func @transform_1(%arg0: i32, %arg1: i32) -> (i32, i32) {
    %c0_i32 = arith.constant 0 : i32
    %c0_i32_0 = arith.constant 0 : i32
    %c0_i32_1 = arith.constant 0 : i32
    return %c0_i32, %c0_i32_0 : i32, i32
  }
  func.func @transform_2(%arg0: i32, %arg1: i32) -> (i32, i32) {
    %c0_i32 = arith.constant 0 : i32
    %c0_i32_0 = arith.constant 0 : i32
    %c0_i32_1 = arith.constant 0 : i32
    return %c0_i32, %c0_i32_0 : i32, i32
  }
  func.func @transform_3(%arg0: i32, %arg1: i32) -> (i32, i32, i32) {
    %c0_i32 = arith.constant 0 : i32
    %c0_i32_0 = arith.constant 0 : i32
    %c0_i32_1 = arith.constant 0 : i32
    %c0_i32_2 = arith.constant 0 : i32
    return %c0_i32, %c0_i32_0, %c0_i32_1 : i32, i32, i32
  }
  func.func @transform_4(%arg0: i32, %arg1: i32) -> (i32, i32, i32) {
    %c0_i32 = arith.constant 0 : i32
    %c0_i32_0 = arith.constant 0 : i32
    %c0_i32_1 = arith.constant 0 : i32
    %c0_i32_2 = arith.constant 0 : i32
    return %c0_i32, %c0_i32_0, %c0_i32_1 : i32, i32, i32
  }
  func.func @transform_5(%arg0: i32, %arg1: i32) -> (i32, i32) {
    %c0_i32 = arith.constant 0 : i32
    %c0_i32_0 = arith.constant 0 : i32
    %c0_i32_1 = arith.constant 0 : i32
    return %c0_i32, %c0_i32_0 : i32, i32
  }
  func.func @transform_6(%arg0: i32, %arg1: i32) -> (i32, i32) {
    %c0_i32 = arith.constant 0 : i32
    %c0_i32_0 = arith.constant 0 : i32
    %c0_i32_1 = arith.constant 0 : i32
    return %c0_i32, %c0_i32_0 : i32, i32
  }
  func.func @transform_7(%arg0: i32, %arg1: i32) -> (i32, i32, i32, i32) {
    %c0_i32 = arith.constant 0 : i32
    %c0_i32_0 = arith.constant 0 : i32
    %c0_i32_1 = arith.constant 0 : i32
    return %arg0, %arg1, %c0_i32, %c0_i32_0 : i32, i32, i32, i32
  }
}

</mosaic_0001>

<llo_original>
// kernel: tpu_custom_call.1
$region0: #{tpu_custom_call.1}
  #allocation0 [shape = 'u32[]', space=smem, size = 0x4, offset = 0x4, fixed_abs, tag = 'smem constant byte address 0x4 - core index']
  #allocation1 [shape = 'u32[144,128]{1,0:T(1,128)}', space=vmem, size = 0x12000, scoped, tag = 'internal scratch']
  #allocation2 [shape = 'bf16[32,384]{1,0:T(16,128)(2,1)}', space=vmem, size = 0x6000, scoped, tag = 'scratch operand']
  %s0 = inlined_call_operand.hbm [shape: bf16[2,1,32,128], index: 0, kind: input, shape index: {}]
  %s1 = inlined_call_operand.hbm [shape: bf16[128,128], index: 1, kind: input, shape index: {}]
  %s2 = inlined_call_operand.vmem [shape: f32[1,128], index: 2, kind: input, shape index: {}]
  %s3 = inlined_call_operand.hbm [shape: bf16[4,384,128], index: 3, kind: input, shape index: {}]
  %s4 = inlined_call_operand.vmem [shape: f32[4,1,128], index: 4, kind: input, shape index: {}]
  %s5 = inlined_call_operand.hbm [shape: bf16[128,128], index: 5, kind: input, shape index: {}]
  %s6 = inlined_call_operand.vmem [shape: f32[1,128], index: 6, kind: input, shape index: {}]
  %s7 = inlined_call_operand.hbm [shape: bf16[2,1,16,128], index: 7, kind: output, shape index: {}]
  %s8 = sld [smem:[#allocation0]]
  $region77: #{tpu_custom_call.1} parent=0
    _
  %s10 = ssub.s32 1, %s8
  %s11 = scalar_select 0, %s10, %s8
  $region1: #{tpu_custom_call.1} parent=0
    #allocation3 [shape = 'u8[16384]{0}', space=vmem, size = 0x4000, scoped, tag = 'input window, operand 0']
    #allocation4 [shape = 's32[2]{0}', space=sflag, size = 0x8, scoped, tag = 'scoped memory for tpu_custom_call.1']
    #allocation5 [shape = 's32[2]{0}', space=sflag, size = 0x8, scoped, tag = 'scoped memory for tpu_custom_call.1']
    #allocation6 [shape = 'u8[32768]{0}', space=vmem, size = 0x8000, scoped, tag = 'input window, operand 1, single buffered']
    #allocation7 [shape = 's32[1]{0}', space=sflag, size = 0x4, scoped, tag = 'scoped memory for tpu_custom_call.1']
    #allocation8 [shape = 'u8[393216]{0}', space=vmem, size = 0x60000, scoped, tag = 'input window, operand 3, single buffered']
    #allocation9 [shape = 'u8[32768]{0}', space=vmem, size = 0x8000, scoped, tag = 'input window, operand 5, single buffered']
    #allocation10 [shape = 's32[1]{0}', space=sflag, size = 0x4, scoped, tag = 'scoped memory for tpu_custom_call.1']
    #allocation11 [shape = 'u8[8192]{0}', space=vmem, size = 0x2000, scoped, tag = 'output window, operand 0']
    %12 = vsyncpa [#allocation4], 0
    %s13 = scalar_lea.sflag [#allocation4], 1
    %14 = vsyncpa %s13, 0
    %15 = vsyncpa [#allocation7], 0
    %16 = vsyncpa [#allocation10], 0
    %17 = vsyncpa [#allocation5], 0
    %s18 = scalar_lea.sflag [#allocation5], 1
    %19 = vsyncpa %s18, 0
    loop: start=0, step=1, limit=4
    $region2: #{tpu_custom_call.1} parent=1 // loop_pre_header
      _
    $region3: #{tpu_custom_call.1} parent=1 // loop_header
      %s21 = sphi 0, %s25
      %p22 = scmp.ge.s32.totalorder %s21, 4
      %s28 = sphi 0, %s40
      %s29 = sphi 0, %s36
      %s30 = sphi 0, %s28
      %s31 = sphi 0, %s29
      %s32 = sphi 0, %s30
      %s33 = sphi 0, %s31
      %s45 = sphi 0, %s47
      %s48 = sphi 0, %s45
      %s49 = sphi 0, %s48
      %s65 = sphi 0, %s49
      %s69 = sphi 0, %s69
      %s71 = sphi 0, %s69
      %s72 = sphi 0, %s71
      %s86 = sphi 0, %s72
      %s90 = sphi 0, %s90
      %s92 = sphi 0, %s90
      %s93 = sphi 0, %s92
      %s107 = sphi 0, %s93
      %s111 = sphi 0, %s111
      %s113 = sphi 0, %s111
      %s114 = sphi 0, %s113
      %s128 = sphi 0, %s114
      %s132 = sphi 0, %s132
      %s134 = sphi 0, %s132
      %s135 = sphi 0, %s134
      %s149 = sphi 0, %s135
      %s153 = sphi 0, %s153
      %s155 = sphi 0, %s153
      %s156 = sphi 0, %s155
      %s170 = sphi 0, %s156
      %s174 = sphi 0, %s174
      %s176 = sphi 0, %s174
      %s177 = sphi 0, %s176
      %s191 = sphi 0, %s177
      %s199 = sphi 0, %s201
      %s202 = sphi 0, %s199
      %s203 = sphi 0, %s202
      %s219 = sphi 0, %s203
    $region4: #{tpu_custom_call.1} parent=1 // loop_header_branch
      %24 = sbr.rel (%p22) target = $region8
    $region5: #{tpu_custom_call.1} parent=1 // loop_body
      %s26 = ssub.s32 %s21, 1
      %s27 = ssub.s32 %s21, 2
      %s34 = sadd.s32 1, %s29
      %p35 = scmp.ge.s32.totalorder %s34, 1
      %s36 = scalar_select %p35, 0, %s34
      %s37 = sadd.s32 1, %s28
      %s38 = scalar_select %p35, %s37, %s28
      %p39 = scmp.ge.s32.totalorder %s38, 2
      %s40 = scalar_select %p39, 0, %s38
      %s41 = ssub.s32 %s28, %s40
      %s42 = ssub.s32 %s29, %s36
      %s43 = sor.u32 %s41, %s42
      %p44 = scmp.eq.s32.totalorder %s43, 0
      %s46 = sadd.s32 %s45, 1
      %s47 = scalar_select %p44, %s45, %s46
      %p50 = pneg %p44
      %p51 = scmp.eq.s32.totalorder %s21, 1
      %p52 = por %p50, %p51
      %p53 = scmp.ne.s32.totalorder %s45, %s48
      %p54 = scmp.eq.s32.totalorder %s21, 0
      %p55 = por %p53, %p54
      %p56 = scmp.ne.s32.totalorder %s45, %s48
      %p57 = scmp.eq.s32.totalorder %s26, 1
      %p58 = por %p56, %p57
      %p59 = scmp.ne.s32.totalorder %s48, %s49
      %p60 = scmp.eq.s32.totalorder %s26, 0
      %p61 = por %p59, %p60
      %p62 = scmp.ne.s32.totalorder %s48, %s49
      %p63 = scmp.eq.s32.totalorder %s27, 1
      %p64 = por %p62, %p63
      %p66 = scmp.ne.s32.totalorder %s49, %s65
      %p67 = scmp.eq.s32.totalorder %s27, 0
      %p68 = por %p66, %p67
      %s70 = sadd.s32 %s69, 1
      %p73 = scmp.eq.s32.totalorder %s21, 1
      %p74 = scmp.ne.s32.totalorder %s69, %s71
      %p75 = scmp.eq.s32.totalorder %s21, 0
      %p76 = por %p74, %p75
      %p77 = scmp.ne.s32.totalorder %s69, %s71
      %p78 = scmp.eq.s32.totalorder %s26, 1
      %p79 = por %p77, %p78
      %p80 = scmp.ne.s32.totalorder %s71, %s72
      %p81 = scmp.eq.s32.totalorder %s26, 0
      %p82 = por %p80, %p81
      %p83 = scmp.ne.s32.totalorder %s71, %s72
      %p84 = scmp.eq.s32.totalorder %s27, 1
      %p85 = por %p83, %p84
      %p87 = scmp.ne.s32.totalorder %s72, %s86
      %p88 = scmp.eq.s32.totalorder %s27, 0
      %p89 = por %p87, %p88
      %s91 = sadd.s32 %s90, 1
      %p94 = scmp.eq.s32.totalorder %s21, 1
      %p95 = scmp.ne.s32.totalorder %s90, %s92
      %p96 = scmp.eq.s32.totalorder %s21, 0
      %p97 = por %p95, %p96
      %p98 = scmp.ne.s32.totalorder %s90, %s92
      %p99 = scmp.eq.s32.totalorder %s26, 1
      %p100 = por %p98, %p99
      %p101 = scmp.ne.s32.totalorder %s92, %s93
      %p102 = scmp.eq.s32.totalorder %s26, 0
      %p103 = por %p101, %p102
      %p104 = scmp.ne.s32.totalorder %s92, %s93
      %p105 = scmp.eq.s32.totalorder %s27, 1
      %p106 = por %p104, %p105
      %p108 = scmp.ne.s32.totalorder %s93, %s107
      %p109 = scmp.eq.s32.totalorder %s27, 0
      %p110 = por %p108, %p109
      %s112 = sadd.s32 %s111, 1
      %p115 = scmp.eq.s32.totalorder %s21, 1
      %p116 = scmp.ne.s32.totalorder %s111, %s113
      %p117 = scmp.eq.s32.totalorder %s21, 0
      %p118 = por %p116, %p117
      %p119 = scmp.ne.s32.totalorder %s111, %s113
      %p120 = scmp.eq.s32.totalorder %s26, 1
      %p121 = por %p119, %p120
      %p122 = scmp.ne.s32.totalorder %s113, %s114
      %p123 = scmp.eq.s32.totalorder %s26, 0
      %p124 = por %p122, %p123
      %p125 = scmp.ne.s32.totalorder %s113, %s114
      %p126 = scmp.eq.s32.totalorder %s27, 1
      %p127 = por %p125, %p126
      %p129 = scmp.ne.s32.totalorder %s114, %s128
      %p130 = scmp.eq.s32.totalorder %s27, 0
      %p131 = por %p129, %p130
      %s133 = sadd.s32 %s132, 1
      %p136 = scmp.eq.s32.totalorder %s21, 1
      %p137 = scmp.ne.s32.totalorder %s132, %s134
      %p138 = scmp.eq.s32.totalorder %s21, 0
      %p139 = por %p137, %p138
      %p140 = scmp.ne.s32.totalorder %s132, %s134
      %p141 = scmp.eq.s32.totalorder %s26, 1
      %p142 = por %p140, %p141
      %p143 = scmp.ne.s32.totalorder %s134, %s135
      %p144 = scmp.eq.s32.totalorder %s26, 0
      %p145 = por %p143, %p144
      %p146 = scmp.ne.s32.totalorder %s134, %s135
      %p147 = scmp.eq.s32.totalorder %s27, 1
      %p148 = por %p146, %p147
      %p150 = scmp.ne.s32.totalorder %s135, %s149
      %p151 = scmp.eq.s32.totalorder %s27, 0
      %p152 = por %p150, %p151
      %s154 = sadd.s32 %s153, 1
      %p157 = scmp.eq.s32.totalorder %s21, 1
      %p158 = scmp.ne.s32.totalorder %s153, %s155
      %p159 = scmp.eq.s32.totalorder %s21, 0
      %p160 = por %p158, %p159
      %p161 = scmp.ne.s32.totalorder %s153, %s155
      %p162 = scmp.eq.s32.totalorder %s26, 1
      %p163 = por %p161, %p162
      %p164 = scmp.ne.s32.totalorder %s155, %s156
      %p165 = scmp.eq.s32.totalorder %s26, 0
      %p166 = por %p164, %p165
      %p167 = scmp.ne.s32.totalorder %s155, %s156
      %p168 = scmp.eq.s32.totalorder %s27, 1
      %p169 = por %p167, %p168
      %p171 = scmp.ne.s32.totalorder %s156, %s170
      %p172 = scmp.eq.s32.totalorder %s27, 0
      %p173 = por %p171, %p172
      %s175 = sadd.s32 %s174, 1
      %p178 = scmp.eq.s32.totalorder %s21, 1
      %p179 = scmp.ne.s32.totalorder %s174, %s176
      %p180 = scmp.eq.s32.totalorder %s21, 0
      %p181 = por %p179, %p180
      %p182 = scmp.ne.s32.totalorder %s174, %s176
      %p183 = scmp.eq.s32.totalorder %s26, 1
      %p184 = por %p182, %p183
      %p185 = scmp.ne.s32.totalorder %s176, %s177
      %p186 = scmp.eq.s32.totalorder %s26, 0
      %p187 = por %p185, %p186
      %p188 = scmp.ne.s32.totalorder %s176, %s177
      %p189 = scmp.eq.s32.totalorder %s27, 1
      %p190 = por %p188, %p189
      %p192 = scmp.ne.s32.totalorder %s177, %s191
      %p193 = scmp.eq.s32.totalorder %s27, 0
      %p194 = por %p192, %p193
      %s195 = ssub.s32 %s28, %s40
      %s196 = ssub.s32 %s29, %s36
      %s197 = sor.u32 %s195, %s196
      %p198 = scmp.eq.s32.totalorder %s197, 0
      %s200 = sadd.s32 %s199, 1
      %s201 = scalar_select %p198, %s199, %s200
      %p204 = pneg %p198
      %p205 = scmp.eq.s32.totalorder %s21, 1
      %p206 = por %p204, %p205
      %p207 = scmp.ne.s32.totalorder %s199, %s202
      %p208 = scmp.eq.s32.totalorder %s21, 0
      %p209 = por %p207, %p208
      %p210 = scmp.ne.s32.totalorder %s199, %s202
      %p211 = scmp.eq.s32.totalorder %s26, 1
      %p212 = por %p210, %p211
      %p213 = scmp.ne.s32.totalorder %s202, %s203
      %p214 = scmp.eq.s32.totalorder %s26, 0
      %p215 = por %p213, %p214
      %p216 = scmp.ne.s32.totalorder %s202, %s203
      %p217 = scmp.eq.s32.totalorder %s27, 1
      %p218 = por %p216, %p217
      %p220 = scmp.ne.s32.totalorder %s203, %s219
      %p221 = scmp.eq.s32.totalorder %s27, 0
      %p222 = por %p220, %p221
      %p223 = scmp.le.s32.totalorder 1, %s21
      %p224 = scmp.lt.s32.totalorder %s21, 3
      %p225 = pnand %p223, %p224
      %p226 = pneg %p225
      // Predicated region
      $region9: #{tpu_custom_call.1} parent=5 // pred_check
        _
      $region10: #{tpu_custom_call.1} parent=5 // pred_check_branch
        %228 = sbr.rel (%p225) target = $region12
      $region11: #{tpu_custom_call.1} parent=5 // pred_region
        %s229 = ssub.s32 %s21, 1
        // Predicated region
        $region13: #{tpu_custom_call.1} parent=11 // pred_check
          %p230 = pneg %p82
        $region14: #{tpu_custom_call.1} parent=11 // pred_check_branch
          %232 = sbr.rel (%p230) target = $region16
        $region15: #{tpu_custom_call.1} parent=11 // pred_region
          %s234 = ssub.s32 1024, 1024
          %235 = vsyncadd [#allocation7], %s234
          %s236 = sshll.u32 [#allocation6], 4
          %s237 = int_to_ptr.vmem [resolvable:$true] %s236
          %242 = dma.hbm_to_vmem [thread:$0]  %s1, 1024, %s237, [#allocation7], 64, 64, 4
        $region16: #{tpu_custom_call.1} parent=11 // pred_fallthru
          _
        // Predicated region
        $region17: #{tpu_custom_call.1} parent=11 // pred_check
          %p243 = pneg %p103
        $region18: #{tpu_custom_call.1} parent=11 // pred_check_branch
          %245 = sbr.rel (%p243) target = $region20
        $region19: #{tpu_custom_call.1} parent=11 // pred_region
          _
        $region20: #{tpu_custom_call.1} parent=11 // pred_fallthru
          _
        // Predicated region
        $region21: #{tpu_custom_call.1} parent=11 // pred_check
          %p246 = pneg %p124
        $region22: #{tpu_custom_call.1} parent=11 // pred_check_branch
          %248 = sbr.rel (%p246) target = $region24
        $region23: #{tpu_custom_call.1} parent=11 // pred_region
          %s250 = ssub.s32 12288, 12288
          %251 = vsyncadd [#allocation7], %s250
          %s252 = sshll.u32 [#allocation8], 4
          %s253 = int_to_ptr.vmem [resolvable:$true] %s252
          %258 = dma.hbm_to_vmem [thread:$0]  %s3, 12288, %s253, [#allocation7], 64, 64, 4
        $region24: #{tpu_custom_call.1} parent=11 // pred_fallthru
          _
        // Predicated region
        $region25: #{tpu_custom_call.1} parent=11 // pred_check
          %p259 = pneg %p145
        $region26: #{tpu_custom_call.1} parent=11 // pred_check_branch
          %261 = sbr.rel (%p259) target = $region28
        $region27: #{tpu_custom_call.1} parent=11 // pred_region
          _
        $region28: #{tpu_custom_call.1} parent=11 // pred_fallthru
          _
        // Predicated region
        $region29: #{tpu_custom_call.1} parent=11 // pred_check
          %p262 = pneg %p166
        $region30: #{tpu_custom_call.1} parent=11 // pred_check_branch
          %264 = sbr.rel (%p262) target = $region32
        $region31: #{tpu_custom_call.1} parent=11 // pred_region
          %s266 = ssub.s32 1024, 1024
          %267 = vsyncadd [#allocation10], %s266
          %s268 = sshll.u32 [#allocation9], 4
          %s269 = int_to_ptr.vmem [resolvable:$true] %s268
          %274 = dma.hbm_to_vmem [thread:$0]  %s5, 1024, %s269, [#allocation10], 64, 64, 4
        $region32: #{tpu_custom_call.1} parent=11 // pred_fallthru
          _
        // Predicated region
        $region33: #{tpu_custom_call.1} parent=11 // pred_check
          %p275 = pneg %p187
        $region34: #{tpu_custom_call.1} parent=11 // pred_check_branch
          %277 = sbr.rel (%p275) target = $region36
        $region35: #{tpu_custom_call.1} parent=11 // pred_region
          _
        $region36: #{tpu_custom_call.1} parent=11 // pred_fallthru
          _
      $region12: #{tpu_custom_call.1} parent=5 // pred_fallthru
        _
      %p278 = scmp.lt.s32.totalorder %s21, 2
      // Predicated region
      $region37: #{tpu_custom_call.1} parent=5 // pred_check
        %p279 = pneg %p278
      $region38: #{tpu_custom_call.1} parent=5 // pred_check_branch
        %281 = sbr.rel (%p279) target = $region40
      $region39: #{tpu_custom_call.1} parent=5 // pred_region
        // Predicated region
        $region41: #{tpu_custom_call.1} parent=39 // pred_check
          %p282 = pneg %p55
        $region42: #{tpu_custom_call.1} parent=39 // pred_check_branch
          %284 = sbr.rel (%p282) target = $region44
        $region43: #{tpu_custom_call.1} parent=39 // pred_region
          %s285 = sand.u32 %s45, 1
          %s286 = scalar_lea.sflag [#allocation4], %s285
          %s287 = sand.u32 %s45, 1
          %s288 = smul.addr %s287, 16
          %s289 = scalar_lea.vmem [#allocation3], %s288
          %s291 = ssub.s32 256, 256
          %292 = vsyncadd %s286, %s291
          %s293 = smul.addr %s29, 4
          %s294 = smul.addr %s28, 4
          %s295 = sadd.s32 %s293, %s294
          %s296 = smul.addr %s295, 64
          %s297 = scalar_lea.hbm %s0, %s296
          %s298 = sshll.u32 %s289, 4
          %s299 = int_to_ptr.vmem [resolvable:$true] %s298
          %304 = dma.hbm_to_vmem [thread:$0]  %s297, 256, %s299, %s286, 64, 64, 4
        $region44: #{tpu_custom_call.1} parent=39 // pred_fallthru
          _
      $region40: #{tpu_custom_call.1} parent=5 // pred_fallthru
        _
      %p305 = scmp.le.s32.totalorder 1, %s21
      %p306 = scmp.lt.s32.totalorder %s21, 3
      %p307 = pnand %p305, %p306
      %p308 = pneg %p307
      // Predicated region
      $region45: #{tpu_custom_call.1} parent=5 // pred_check
        _
      $region46: #{tpu_custom_call.1} parent=5 // pred_check_branch
        %310 = sbr.rel (%p307) target = $region48
      $region47: #{tpu_custom_call.1} parent=5 // pred_region
        %s311 = ssub.s32 %s21, 1
        %s312 = sand.u32 %s48, 1
        %s313 = scalar_lea.sflag [#allocation4], %s312
        %s314 = sand.u32 %s48, 1
        %s315 = smul.addr %s314, 16
        %s316 = scalar_lea.vmem [#allocation3], %s315
        // Predicated region
        $region49: #{tpu_custom_call.1} parent=47 // pred_check
          %p317 = pneg %p61
        $region50: #{tpu_custom_call.1} parent=47 // pred_check_branch
          %319 = sbr.rel (%p317) target = $region52
        $region51: #{tpu_custom_call.1} parent=47 // pred_region
          %320 = dma.done %s313, 256
        $region52: #{tpu_custom_call.1} parent=47 // pred_fallthru
          _
        // Predicated region
        $region53: #{tpu_custom_call.1} parent=47 // pred_check
          %p321 = pneg %p82
        $region54: #{tpu_custom_call.1} parent=47 // pred_check_branch
          %323 = sbr.rel (%p321) target = $region56
        $region55: #{tpu_custom_call.1} parent=47 // pred_region
          %324 = dma.done [#allocation7], 1024
        $region56: #{tpu_custom_call.1} parent=47 // pred_fallthru
          _
        // Predicated region
        $region57: #{tpu_custom_call.1} parent=47 // pred_check
          %p325 = pneg %p124
        $region58: #{tpu_custom_call.1} parent=47 // pred_check_branch
          %327 = sbr.rel (%p325) target = $region60
        $region59: #{tpu_custom_call.1} parent=47 // pred_region
          %328 = dma.done [#allocation7], 12288
        $region60: #{tpu_custom_call.1} parent=47 // pred_fallthru
          _
        // Predicated region
        $region61: #{tpu_custom_call.1} parent=47 // pred_check
          %p329 = pneg %p166
        $region62: #{tpu_custom_call.1} parent=47 // pred_check_branch
          %331 = sbr.rel (%p329) target = $region64
        $region63: #{tpu_custom_call.1} parent=47 // pred_region
          %332 = dma.done [#allocation10], 1024
        $region64: #{tpu_custom_call.1} parent=47 // pred_fallthru
          _
        %s333 = sand.u32 %s48, 1
        %s334 = scalar_lea.sflag [#allocation4], %s333
        %s335 = sand.u32 %s48, 1
        %s336 = smul.addr %s335, 16
        %s337 = scalar_lea.vmem [#allocation3], %s336
        %p338 = pneg %p61
        %p339 = pneg %p58
        %p340 = pneg %p82
        %p341 = pneg %p79
        %p342 = pneg %p103
        %p343 = pneg %p100
        %p344 = pneg %p124
        %p345 = pneg %p121
        %p346 = pneg %p145
        %p347 = pneg %p142
        %p348 = pneg %p166
        %p349 = pneg %p163
        %p350 = pneg %p187
        %p351 = pneg %p184
        %p352 = pneg %p215
        %p353 = pneg %p212
        %s354 = sand.u32 %s202, 1
        %s355 = scalar_lea.sflag [#allocation5], %s354
        %s356 = sand.u32 %s202, 1
        %s357 = smul.addr %s356, 8
        %s358 = scalar_lea.vmem [#allocation11], %s357
        %s360 = smul.u32 %s31, 16
        %s361 = ssub.s32 %s360, 8
        %v362 = vlaneseq
        %v363 = vshrl.u32 %v362, 7
        %v364 = vadd.s32 %v363, 8
        %v365 = vadd.s32 %v363, 16
        %v366 = vadd.s32 %v363, 24
        %v367 = vstv %s361
        %v368 = vadd.s32 %v363, %v367
        %v369 = vadd.s32 %v364, %v367
        %v370 = vadd.s32 %v365, %v367
        %v371 = vadd.s32 %v366, %v367
        %vm372 = vcmp.ge.s32.totalorder %v368, 1
        %vm373 = vcmp.ge.s32.totalorder %v369, 1
        %vm374 = vcmp.ge.s32.totalorder %v370, 1
        %vm375 = vcmp.ge.s32.totalorder %v371, 1
        %v376 = vsel %vm372, 1, 0
        %v377 = vsel %vm373, 1, 0
        %v378 = vsel %vm374, 1, 0
        %v379 = vsel %vm375, 1, 0
        %v380 = vcvt.s32.f32 %v376
        %v381 = vcvt.s32.f32 %v377
        %v382 = vcvt.s32.f32 %v378
        %v383 = vcvt.s32.f32 %v379
        %vm384 = vcmp.lt.s32.totalorder %v368, 15
        %vm385 = vcmp.lt.s32.totalorder %v369, 15
        %vm386 = vcmp.lt.s32.totalorder %v370, 15
        %vm387 = vcmp.lt.s32.totalorder %v371, 15
        %v388 = vsel %vm384, 1, 0
        %v389 = vsel %vm385, 1, 0
        %v390 = vsel %vm386, 1, 0
        %v391 = vsel %vm387, 1, 0
        %v392 = vcvt.s32.f32 %v388
        %v393 = vcvt.s32.f32 %v389
        %v394 = vcvt.s32.f32 %v390
        %v395 = vcvt.s32.f32 %v391
        %v396 = vld [vmem:[%s316] sm:$0xf]
        %v397 = vld [vmem:[%s316 + $0x4] sm:$0xf]
        %v398 = vld [vmem:[%s316 + $0x8] sm:$0xf]
        %v399 = vld [vmem:[%s316 + $0xc] sm:$0xf]
        %v400 = vld [vmem:[#allocation6] sm:$0xf]
        %v401 = vld [vmem:[#allocation6 + $0x4] sm:$0xf]
        %v402 = vld [vmem:[#allocation6 + $0x8] sm:$0xf]
        %v403 = vld [vmem:[#allocation6 + $0xc] sm:$0xf]
        %v404 = vld [vmem:[#allocation6 + $0x10] sm:$0xf]
        %v405 = vld [vmem:[#allocation6 + $0x14] sm:$0xf]
        %v406 = vld [vmem:[#allocation6 + $0x18] sm:$0xf]
        %v407 = vld [vmem:[#allocation6 + $0x1c] sm:$0xf]
        %v408 = vld [vmem:[#allocation6 + $0x20] sm:$0xf]
        %v409 = vld [vmem:[#allocation6 + $0x24] sm:$0xf]
        %v410 = vld [vmem:[#allocation6 + $0x28] sm:$0xf]
        %v411 = vld [vmem:[#allocation6 + $0x2c] sm:$0xf]
        %v412 = vld [vmem:[#allocation6 + $0x30] sm:$0xf]
        %v413 = vld [vmem:[#allocation6 + $0x34] sm:$0xf]
        %v414 = vld [vmem:[#allocation6 + $0x38] sm:$0xf]
        %v415 = vld [vmem:[#allocation6 + $0x3c] sm:$0xf]
        %v416 = vld [vmem:[%s2] sm:$0x1]
        %v418 = vlaneseq
        %v419 = vshrl.u32 %v418, 7
        %v420 = vsub.s32 0, %v419
        %v421 = vrot.slane %v416, %v420
        %v427 = vunpack.c.l.b16 %v396
        %v428 = vunpack.c.l.b16 %v397
        %v429 = vunpack.c.l.b16 %v398
        %v430 = vunpack.c.l.b16 %v399
        %v431 = vpack.c.b16 %v428, %v427
        %v432 = vpack.c.b16 %v430, %v429
        %v451 = vunpack.c.l.b16 %v400
        %v452 = vunpack.c.l.b16 %v401
        %v453 = vunpack.c.l.b16 %v402
        %v454 = vunpack.c.l.b16 %v403
        %v455 = vunpack.c.l.b16 %v404
        %v456 = vunpack.c.l.b16 %v405
        %v457 = vunpack.c.l.b16 %v406
        %v458 = vunpack.c.l.b16 %v407
        %v459 = vunpack.c.l.b16 %v408
        %v460 = vunpack.c.l.b16 %v409
        %v461 = vunpack.c.l.b16 %v410
        %v462 = vunpack.c.l.b16 %v411
        %v463 = vunpack.c.l.b16 %v412
        %v464 = vunpack.c.l.b16 %v413
        %v465 = vunpack.c.l.b16 %v414
        %v466 = vunpack.c.l.b16 %v415
        %v467 = vpack.c.b16 %v452, %v451
        %v468 = vpack.c.b16 %v454, %v453
        %v469 = vpack.c.b16 %v456, %v455
        %v470 = vpack.c.b16 %v458, %v457
        %v471 = vpack.c.b16 %v460, %v459
        %v472 = vpack.c.b16 %v462, %v461
        %v473 = vpack.c.b16 %v464, %v463
        %v474 = vpack.c.b16 %v466, %v465
        %483 = vmatprep.subr.bf16.mxu0 0
        %484 = vmatpush1.bf16.msra.mxu0 %v467
        %485 = vmatprep.subr.bf16.mxu0 0
        %486 = vmatpush1.bf16.msra.mxu0 %v468
        %487 = vmatprep.subr.bf16.mxu0 0
        %488 = vmatpush1.bf16.msra.mxu0 %v469
        %489 = vmatprep.subr.bf16.mxu0 0
        %490 = vmatpush1.bf16.msra.mxu0 %v470
        %491 = vmatprep.subr.bf16.mxu0 0
        %492 = vmatpush1.bf16.msra.mxu0 %v471
        %493 = vmatprep.subr.bf16.mxu0 0
        %494 = vmatpush1.bf16.msra.mxu0 %v472
        %495 = vmatprep.subr.bf16.mxu0 0
        %496 = vmatpush1.bf16.msra.mxu0 %v473
        %497 = vmatprep.subr.bf16.mxu0 0
        %498 = vmatpush1.bf16.msra.mxu0 %v474
        %499 = vmatprep.subr.bf16.mxu0 0
        %500 = vmatpush1.bf16.msra.mxu0 0
        %501 = vmatprep.subr.bf16.mxu0 0
        %502 = vmatpush1.bf16.msra.mxu0 0
        %503 = vmatprep.subr.bf16.mxu0 0
        %504 = vmatpush1.bf16.msra.mxu0 0
        %505 = vmatprep.subr.bf16.mxu0 0
        %506 = vmatpush1.bf16.msra.mxu0 0
        %507 = vmatprep.subr.bf16.mxu0 0
        %508 = vmatpush1.bf16.msra.mxu0 0
        %509 = vmatprep.subr.bf16.mxu0 0
        %510 = vmatpush1.bf16.msra.mxu0 0
        %511 = vmatprep.subr.bf16.mxu0 0
        %512 = vmatpush1.bf16.msra.mxu0 0
        %513 = vmatprep.subr.bf16.mxu0 0
        %514 = vmatpush1.bf16.msra.mxu0 0
        %515 = vmatprep.mubr.bf16.mxu0 0
        %516 = vmatmul.mubr.bf16.gmra.mrb[0].mxu0 %v431
        %v517 = vpop.f32.mrb[0].mxu0
        %v518 = vadd.f32 %v421, %v517
        %v519 = vpop.f32.mrb[0].mxu0
        %v520 = vpop.f32.mrb[0].mxu0
        %v521 = vadd.f32 %v421, %v520
        %v522 = vpop.f32.mrb[0].mxu0
        %523 = vmatprep.mubr.bf16.mxu0 0
        %524 = vmatmul.mubr.bf16.gmra.mrb[0].mxu0 %v432
        %v525 = vpop.f32.mrb[0].mxu0
        %v526 = vadd.f32 %v421, %v525
        %v527 = vpop.f32.mrb[0].mxu0
        %v528 = vpop.f32.mrb[0].mxu0
        %v529 = vadd.f32 %v421, %v528
        %v530 = vpop.f32.mrb[0].mxu0
        %531 = vdwg.mxu0
        %v532 = vpack.c.bf16 %v521, %v518
        %v533 = vpack.c.bf16 %v529, %v526
        %534 = vst [vmem:[#allocation2 + $0x8] sm:$0xff] %v532
        %535 = vst [vmem:[#allocation2 + $0x20] sm:$0xff] %v533
        %v536 = vrot.slane %v518, 7
        %v537 = vrot.slane %v521, 7
        %v538 = vrot.slane %v526, 7
        %v539 = vrot.slane %v529, 7
        %vm540 = vcmp.lt.s32.totalorder %v363, 1
        %v541 = vsel %vm540, %v538, %v539
        %v542 = vsel %vm540, %v537, %v538
        %v543 = vsel %vm540, %v536, %v537
        %v544 = vsel %vm540, %v539, %v536
        %v545 = vmul.f32 %v544, %v380
        %v546 = vmul.f32 %v543, %v381
        %v547 = vmul.f32 %v542, %v382
        %v548 = vmul.f32 %v541, %v383
        %v549 = vpack.c.bf16 %v546, %v545
        %v550 = vpack.c.bf16 %v548, %v547
        %551 = vst [vmem:[#allocation2] sm:$0xff] %v549
        %552 = vst [vmem:[#allocation2 + $0x18] sm:$0xff] %v550
        %v553 = vrot.slane %v518, 1
        %v554 = vrot.slane %v521, 1
        %v555 = vrot.slane %v526, 1
        %v556 = vrot.slane %v529, 1
        %vm557 = vcmp.lt.s32.totalorder %v363, 7
        %v558 = vsel %vm557, %v555, %v556
        %v559 = vsel %vm557, %v554, %v555
        %v560 = vsel %vm557, %v553, %v554
        %v561 = vsel %vm557, %v556, %v553
        %v562 = vmul.f32 %v560, %v392
        %v563 = vmul.f32 %v559, %v393
        %v564 = vmul.f32 %v558, %v394
        %v565 = vmul.f32 %v561, %v395
        %v566 = vpack.c.bf16 %v563, %v562
        %v567 = vpack.c.bf16 %v565, %v564
        %568 = vst [vmem:[#allocation2 + $0x10] sm:$0xff] %v566
        %569 = vst [vmem:[#allocation2 + $0x28] sm:$0xff] %v567
        %v570 = vld [vmem:[#allocation2] sm:$0xff]
        %v571 = vld [vmem:[#allocation2 + $0x8] sm:$0xff]
        %v572 = vld [vmem:[#allocation2 + $0x10] sm:$0xff]
        %v573 = vld [vmem:[#allocation2 + $0x18] sm:$0xff]
        %v574 = vld [vmem:[#allocation2 + $0x20] sm:$0xff]
        %v575 = vld [vmem:[#allocation2 + $0x28] sm:$0xff]
        %v576 = vld [vmem:[#allocation8] sm:$0xf]
        %v577 = vld [vmem:[#allocation8 + $0x4] sm:$0xf]
        %v578 = vld [vmem:[#allocation8 + $0x8] sm:$0xf]
        %v579 = vld [vmem:[#allocation8 + $0xc] sm:$0xf]
        %v580 = vld [vmem:[#allocation8 + $0x10] sm:$0xf]
        %v581 = vld [vmem:[#allocation8 + $0x14] sm:$0xf]
        %v582 = vld [vmem:[#allocation8 + $0x18] sm:$0xf]
        %v583 = vld [vmem:[#allocation8 + $0x1c] sm:$0xf]
        %v584 = vld [vmem:[#allocation8 + $0x20] sm:$0xf]
        %v585 = vld [vmem:[#allocation8 + $0x24] sm:$0xf]
        %v586 = vld [vmem:[#allocation8 + $0x28] sm:$0xf]
        %v587 = vld [vmem:[#allocation8 + $0x2c] sm:$0xf]
        %v588 = vld [vmem:[#allocation8 + $0x30] sm:$0xf]
        %v589 = vld [vmem:[#allocation8 + $0x34] sm:$0xf]
        %v590 = vld [vmem:[#allocation8 + $0x38] sm:$0xf]
        %v591 = vld [vmem:[#allocation8 + $0x3c] sm:$0xf]
        %v592 = vld [vmem:[#allocation8 + $0x40] sm:$0xf]
        %v593 = vld [vmem:[#allocation8 + $0x44] sm:$0xf]
        %v594 = vld [vmem:[#allocation8 + $0x48] sm:$0xf]
        %v595 = vld [vmem:[#allocation8 + $0x4c] sm:$0xf]
        %v596 = vld [vmem:[#allocation8 + $0x50] sm:$0xf]
        %v597 = vld [vmem:[#allocation8 + $0x54] sm:$0xf]
        %v598 = vld [vmem:[#allocation8 + $0x58] sm:$0xf]
        %v599 = vld [vmem:[#allocation8 + $0x5c] sm:$0xf]
        %v600 = vld [vmem:[#allocation8 + $0x60] sm:$0xf]
        %v601 = vld [vmem:[#allocation8 + $0x64] sm:$0xf]
        %v602 = vld [vmem:[#allocation8 + $0x68] sm:$0xf]
        %v603 = vld [vmem:[#allocation8 + $0x6c] sm:$0xf]
        %v604 = vld [vmem:[#allocation8 + $0x70] sm:$0xf]
        %v605 = vld [vmem:[#allocation8 + $0x74] sm:$0xf]
        %v606 = vld [vmem:[#allocation8 + $0x78] sm:$0xf]
        %v607 = vld [vmem:[#allocation8 + $0x7c] sm:$0xf]
        %v608 = vld [vmem:[#allocation8 + $0x80] sm:$0xf]
        %v609 = vld [vmem:[#allocation8 + $0x84] sm:$0xf]
        %v610 = vld [vmem:[#allocation8 + $0x88] sm:$0xf]
        %v611 = vld [vmem:[#allocation8 + $0x8c] sm:$0xf]
        %v612 = vld [vmem:[#allocation8 + $0x90] sm:$0xf]
        %v613 = vld [vmem:[#allocation8 + $0x94] sm:$0xf]
        %v614 = vld [vmem:[#allocation8 + $0x98] sm:$0xf]
        %v615 = vld [vmem:[#allocation8 + $0x9c] sm:$0xf]
        %v616 = vld [vmem:[#allocation8 + $0xa0] sm:$0xf]
        %v617 = vld [vmem:[#allocation8 + $0xa4] sm:$0xf]
        %v618 = vld [vmem:[#allocation8 + $0xa8] sm:$0xf]
        %v619 = vld [vmem:[#allocation8 + $0xac] sm:$0xf]
        %v620 = vld [vmem:[#allocation8 + $0xb0] sm:$0xf]
        %v621 = vld [vmem:[#allocation8 + $0xb4] sm:$0xf]
        %v622 = vld [vmem:[#allocation8 + $0xb8] sm:$0xf]
        %v623 = vld [vmem:[#allocation8 + $0xbc] sm:$0xf]
        %v624 = vld [vmem:[%s4] sm:$0x1]
        %v626 = vlaneseq
        %v627 = vshrl.u32 %v626, 7
        %v628 = vsub.s32 0, %v627
        %v629 = vrot.slane %v624, %v628
        %v679 = vunpack.c.l.b16 %v576
        %v680 = vunpack.c.l.b16 %v577
        %v681 = vunpack.c.l.b16 %v578
        %v682 = vunpack.c.l.b16 %v579
        %v683 = vunpack.c.l.b16 %v580
        %v684 = vunpack.c.l.b16 %v581
        %v685 = vunpack.c.l.b16 %v582
        %v686 = vunpack.c.l.b16 %v583
        %v687 = vunpack.c.l.b16 %v584
        %v688 = vunpack.c.l.b16 %v585
        %v689 = vunpack.c.l.b16 %v586
        %v690 = vunpack.c.l.b16 %v587
        %v691 = vunpack.c.l.b16 %v588
        %v692 = vunpack.c.l.b16 %v589
        %v693 = vunpack.c.l.b16 %v590
        %v694 = vunpack.c.l.b16 %v591
        %v695 = vunpack.c.l.b16 %v592
        %v696 = vunpack.c.l.b16 %v593
        %v697 = vunpack.c.l.b16 %v594
        %v698 = vunpack.c.l.b16 %v595
        %v699 = vunpack.c.l.b16 %v596
        %v700 = vunpack.c.l.b16 %v597
        %v701 = vunpack.c.l.b16 %v598
        %v702 = vunpack.c.l.b16 %v599
        %v703 = vunpack.c.l.b16 %v600
        %v704 = vunpack.c.l.b16 %v601
        %v705 = vunpack.c.l.b16 %v602
        %v706 = vunpack.c.l.b16 %v603
        %v707 = vunpack.c.l.b16 %v604
        %v708 = vunpack.c.l.b16 %v605
        %v709 = vunpack.c.l.b16 %v606
        %v710 = vunpack.c.l.b16 %v607
        %v711 = vunpack.c.l.b16 %v608
        %v712 = vunpack.c.l.b16 %v609
        %v713 = vunpack.c.l.b16 %v610
        %v714 = vunpack.c.l.b16 %v611
        %v715 = vunpack.c.l.b16 %v612
        %v716 = vunpack.c.l.b16 %v613
        %v717 = vunpack.c.l.b16 %v614
        %v718 = vunpack.c.l.b16 %v615
        %v719 = vunpack.c.l.b16 %v616
        %v720 = vunpack.c.l.b16 %v617
        %v721 = vunpack.c.l.b16 %v618
        %v722 = vunpack.c.l.b16 %v619
        %v723 = vunpack.c.l.b16 %v620
        %v724 = vunpack.c.l.b16 %v621
        %v725 = vunpack.c.l.b16 %v622
        %v726 = vunpack.c.l.b16 %v623
        %v727 = vpack.c.b16 %v680, %v679
        %v728 = vpack.c.b16 %v682, %v681
        %v729 = vpack.c.b16 %v684, %v683
        %v730 = vpack.c.b16 %v686, %v685
        %v731 = vpack.c.b16 %v688, %v687
        %v732 = vpack.c.b16 %v690, %v689
        %v733 = vpack.c.b16 %v692, %v691
        %v734 = vpack.c.b16 %v694, %v693
        %v735 = vpack.c.b16 %v696, %v695
        %v736 = vpack.c.b16 %v698, %v697
        %v737 = vpack.c.b16 %v700, %v699
        %v738 = vpack.c.b16 %v702, %v701
        %v739 = vpack.c.b16 %v704, %v703
        %v740 = vpack.c.b16 %v706, %v705
        %v741 = vpack.c.b16 %v708, %v707
        %v742 = vpack.c.b16 %v710, %v709
        %v743 = vpack.c.b16 %v712, %v711
        %v744 = vpack.c.b16 %v714, %v713
        %v745 = vpack.c.b16 %v716, %v715
        %v746 = vpack.c.b16 %v718, %v717
        %v747 = vpack.c.b16 %v720, %v719
        %v748 = vpack.c.b16 %v722, %v721
        %v749 = vpack.c.b16 %v724, %v723
        %v750 = vpack.c.b16 %v726, %v725
        %775 = vmatprep.subr.bf16.mxu0 0
        %776 = vmatpush1.bf16.msra.mxu0 %v727
        %777 = vmatprep.subr.bf16.mxu0 0
        %778 = vmatpush1.bf16.msra.mxu0 %v728
        %779 = vmatprep.subr.bf16.mxu0 0
        %780 = vmatpush1.bf16.msra.mxu0 %v729
        %781 = vmatprep.subr.bf16.mxu0 0
        %782 = vmatpush1.bf16.msra.mxu0 %v730
        %783 = vmatprep.subr.bf16.mxu0 0
        %784 = vmatpush1.bf16.msra.mxu0 %v731
        %785 = vmatprep.subr.bf16.mxu0 0
        %786 = vmatpush1.bf16.msra.mxu0 %v732
        %787 = vmatprep.subr.bf16.mxu0 0
        %788 = vmatpush1.bf16.msra.mxu0 %v733
        %789 = vmatprep.subr.bf16.mxu0 0
        %790 = vmatpush1.bf16.msra.mxu0 %v734
        %791 = vmatprep.subr.bf16.mxu0 0
        %792 = vmatpush1.bf16.msra.mxu0 %v735
        %793 = vmatprep.subr.bf16.mxu0 0
        %794 = vmatpush1.bf16.msra.mxu0 %v736
        %795 = vmatprep.subr.bf16.mxu0 0
        %796 = vmatpush1.bf16.msra.mxu0 %v737
        %797 = vmatprep.subr.bf16.mxu0 0
        %798 = vmatpush1.bf16.msra.mxu0 %v738
        %799 = vmatprep.subr.bf16.mxu0 0
        %800 = vmatpush1.bf16.msra.mxu0 %v739
        %801 = vmatprep.subr.bf16.mxu0 0
        %802 = vmatpush1.bf16.msra.mxu0 %v740
        %803 = vmatprep.subr.bf16.mxu0 0
        %804 = vmatpush1.bf16.msra.mxu0 %v741
        %805 = vmatprep.subr.bf16.mxu0 0
        %806 = vmatpush1.bf16.msra.mxu0 %v742
        %807 = vmatprep.mubr.bf16.mxu0 %v571
        %808 = vmatmul.mubr.bf16.gmra.mrb[0].mxu0 %v570
        %v809 = vpop.f32.mrb[0].mxu0
        %v810 = vadd.f32 %v629, %v809
        %v811 = vpop.f32.mrb[0].mxu0
        %v812 = vpop.f32.mrb[0].mxu0
        %v813 = vadd.f32 %v629, %v812
        %v814 = vpop.f32.mrb[0].mxu0
        %815 = vmatprep.mubr.bf16.mxu0 %v574
        %816 = vmatmul.mubr.bf16.gmra.mrb[0].mxu0 %v573
        %v817 = vpop.f32.mrb[0].mxu0
        %v818 = vadd.f32 %v629, %v817
        %v819 = vpop.f32.mrb[0].mxu0
        %v820 = vpop.f32.mrb[0].mxu0
        %v821 = vadd.f32 %v629, %v820
        %v822 = vpop.f32.mrb[0].mxu0
        %823 = vdwg.mxu0
        %824 = vmatprep.subr.bf16.mxu0 0
        %825 = vmatpush1.bf16.msra.mxu0 %v743
        %826 = vmatprep.subr.bf16.mxu0 0
        %827 = vmatpush1.bf16.msra.mxu0 %v744
        %828 = vmatprep.subr.bf16.mxu0 0
        %829 = vmatpush1.bf16.msra.mxu0 %v745
        %830 = vmatprep.subr.bf16.mxu0 0
        %831 = vmatpush1.bf16.msra.mxu0 %v746
        %832 = vmatprep.subr.bf16.mxu0 0
        %833 = vmatpush1.bf16.msra.mxu0 %v747
        %834 = vmatprep.subr.bf16.mxu0 0
        %835 = vmatpush1.bf16.msra.mxu0 %v748
        %836 = vmatprep.subr.bf16.mxu0 0
        %837 = vmatpush1.bf16.msra.mxu0 %v749
        %838 = vmatprep.subr.bf16.mxu0 0
        %839 = vmatpush1.bf16.msra.mxu0 %v750
        %840 = vmatprep.subr.bf16.mxu0 0
        %841 = vmatpush1.bf16.msra.mxu0 0
        %842 = vmatprep.subr.bf16.mxu0 0
        %843 = vmatpush1.bf16.msra.mxu0 0
        %844 = vmatprep.subr.bf16.mxu0 0
        %845 = vmatpush1.bf16.msra.mxu0 0
        %846 = vmatprep.subr.bf16.mxu0 0
        %847 = vmatpush1.bf16.msra.mxu0 0
        %848 = vmatprep.subr.bf16.mxu0 0
        %849 = vmatpush1.bf16.msra.mxu0 0
        %850 = vmatprep.subr.bf16.mxu0 0
        %851 = vmatpush1.bf16.msra.mxu0 0
        %852 = vmatprep.subr.bf16.mxu0 0
        %853 = vmatpush1.bf16.msra.mxu0 0
        %854 = vmatprep.subr.bf16.mxu0 0
        %855 = vmatpush1.bf16.msra.mxu0 0
        %856 = vmatprep.mubr.bf16.mxu0 0
        %857 = vmatmul.mubr.bf16.gmra.mrb[0].mxu0 %v572
        %v858 = vpop.f32.mrb[0].mxu0
        %v859 = vadd.f32 %v810, %v858
        %v860 = vpop.f32.mrb[0].mxu0
        %v861 = vpop.f32.mrb[0].mxu0
        %v862 = vadd.f32 %v813, %v861
        %v863 = vpop.f32.mrb[0].mxu0
        %864 = vmatprep.mubr.bf16.mxu0 0
        %865 = vmatmul.mubr.bf16.gmra.mrb[0].mxu0 %v575
        %v866 = vpop.f32.mrb[0].mxu0
        %v867 = vadd.f32 %v818, %v866
        %v868 = vpop.f32.mrb[0].mxu0
        %v869 = vpop.f32.mrb[0].mxu0
        %v870 = vadd.f32 %v821, %v869
        %v871 = vpop.f32.mrb[0].mxu0
        %872 = vdwg.mxu0
        %v873 = vmul.f32 %v859, %v859
        %v874 = vmul.f32 %v862, %v862
        %v875 = vmul.f32 %v867, %v867
        %v876 = vmul.f32 %v870, %v870
        %v877 = vmul.f32 %v859, %v873
        %v878 = vmul.f32 %v862, %v874
        %v879 = vmul.f32 %v867, %v875
        %v880 = vmul.f32 %v870, %v876
        %v881 = vmul.f32 %v877, 0.044715
        %v882 = vmul.f32 %v878, 0.044715
        %v883 = vmul.f32 %v879, 0.044715
        %v884 = vmul.f32 %v880, 0.044715
        %v885 = vadd.f32 %v859, %v881
        %v886 = vadd.f32 %v862, %v882
        %v887 = vadd.f32 %v867, %v883
        %v888 = vadd.f32 %v870, %v884
        %v889 = vmul.f32 %v885, 0.7978846
        %v890 = vmul.f32 %v886, 0.7978846
        %v891 = vmul.f32 %v887, 0.7978846
        %v892 = vmul.f32 %v888, 0.7978846
        %v893 = vtanh.pop %v889
        %v894 = vtanh.pop %v890
        %v895 = vtanh.pop %v891
        %v896 = vtanh.pop %v892
        %v897 = vadd.f32 %v893, 1.0
        %v898 = vadd.f32 %v894, 1.0
        %v899 = vadd.f32 %v895, 1.0
        %v900 = vadd.f32 %v896, 1.0
        %v901 = vmul.f32 %v897, 0.5
        %v902 = vmul.f32 %v898, 0.5
        %v903 = vmul.f32 %v899, 0.5
        %v904 = vmul.f32 %v900, 0.5
        %v905 = vmul.f32 %v859, %v901
        %v906 = vmul.f32 %v862, %v902
        %v907 = vmul.f32 %v867, %v903
        %v908 = vmul.f32 %v870, %v904
        %v909 = vpack.c.bf16 %v906, %v905
        %v910 = vpack.c.bf16 %v908, %v907
        %911 = vst [vmem:[#allocation2 + $0x8] sm:$0xff] %v909
        %912 = vst [vmem:[#allocation2 + $0x20] sm:$0xff] %v910
        %v913 = vrot.slane %v905, 7
        %v914 = vrot.slane %v906, 7
        %v915 = vrot.slane %v907, 7
        %v916 = vrot.slane %v908, 7
        %v917 = vsel %vm540, %v915, %v916
        %v918 = vsel %vm540, %v914, %v915
        %v919 = vsel %vm540, %v913, %v914
        %v920 = vsel %vm540, %v916, %v913
        %v921 = vmul.f32 %v920, %v380
        %v922 = vmul.f32 %v919, %v381
        %v923 = vmul.f32 %v918, %v382
        %v924 = vmul.f32 %v917, %v383
        %v925 = vpack.c.bf16 %v922, %v921
        %v926 = vpack.c.bf16 %v924, %v923
        %927 = vst [vmem:[#allocation2] sm:$0xff] %v925
        %928 = vst [vmem:[#allocation2 + $0x18] sm:$0xff] %v926
        %v929 = vrot.slane %v905, 1
        %v930 = vrot.slane %v906, 1
        %v931 = vrot.slane %v907, 1
        %v932 = vrot.slane %v908, 1
        %v933 = vsel %vm557, %v931, %v932
        %v934 = vsel %vm557, %v930, %v931
        %v935 = vsel %vm557, %v929, %v930
        %v936 = vsel %vm557, %v932, %v929
        %v937 = vmul.f32 %v935, %v392
        %v938 = vmul.f32 %v934, %v393
        %v939 = vmul.f32 %v933, %v394
        %v940 = vmul.f32 %v936, %v395
        %v941 = vpack.c.bf16 %v938, %v937
        %v942 = vpack.c.bf16 %v940, %v939
        %943 = vst [vmem:[#allocation2 + $0x10] sm:$0xff] %v941
        %944 = vst [vmem:[#allocation2 + $0x28] sm:$0xff] %v942
        %v945 = vld [vmem:[#allocation2] sm:$0xff]
        %v946 = vld [vmem:[#allocation2 + $0x8] sm:$0xff]
        %v947 = vld [vmem:[#allocation2 + $0x10] sm:$0xff]
        %v948 = vld [vmem:[#allocation2 + $0x18] sm:$0xff]
        %v949 = vld [vmem:[#allocation2 + $0x20] sm:$0xff]
        %v950 = vld [vmem:[#allocation2 + $0x28] sm:$0xff]
        %s951 = scalar_lea.vmem [#allocation8], 192
        %v952 = vld [vmem:[%s951] sm:$0xf]
        %v953 = vld [vmem:[%s951 + $0x4] sm:$0xf]
        %v954 = vld [vmem:[%s951 + $0x8] sm:$0xf]
        %v955 = vld [vmem:[%s951 + $0xc] sm:$0xf]
        %v956 = vld [vmem:[%s951 + $0x10] sm:$0xf]
        %v957 = vld [vmem:[%s951 + $0x14] sm:$0xf]
        %v958 = vld [vmem:[%s951 + $0x18] sm:$0xf]
        %v959 = vld [vmem:[%s951 + $0x1c] sm:$0xf]
        %v960 = vld [vmem:[%s951 + $0x20] sm:$0xf]
        %v961 = vld [vmem:[%s951 + $0x24] sm:$0xf]
        %v962 = vld [vmem:[%s951 + $0x28] sm:$0xf]
        %v963 = vld [vmem:[%s951 + $0x2c] sm:$0xf]
        %v964 = vld [vmem:[%s951 + $0x30] sm:$0xf]
        %v965 = vld [vmem:[%s951 + $0x34] sm:$0xf]
        %v966 = vld [vmem:[%s951 + $0x38] sm:$0xf]
        %v967 = vld [vmem:[%s951 + $0x3c] sm:$0xf]
        %v968 = vld [vmem:[%s951 + $0x40] sm:$0xf]
        %v969 = vld [vmem:[%s951 + $0x44] sm:$0xf]
        %v970 = vld [vmem:[%s951 + $0x48] sm:$0xf]
        %v971 = vld [vmem:[%s951 + $0x4c] sm:$0xf]
        %v972 = vld [vmem:[%s951 + $0x50] sm:$0xf]
        %v973 = vld [vmem:[%s951 + $0x54] sm:$0xf]
        %v974 = vld [vmem:[%s951 + $0x58] sm:$0xf]
        %v975 = vld [vmem:[%s951 + $0x5c] sm:$0xf]
        %v976 = vld [vmem:[%s951 + $0x60] sm:$0xf]
        %v977 = vld [vmem:[%s951 + $0x64] sm:$0xf]
        %v978 = vld [vmem:[%s951 + $0x68] sm:$0xf]
        %v979 = vld [vmem:[%s951 + $0x6c] sm:$0xf]
        %v980 = vld [vmem:[%s951 + $0x70] sm:$0xf]
        %v981 = vld [vmem:[%s951 + $0x74] sm:$0xf]
        %v982 = vld [vmem:[%s951 + $0x78] sm:$0xf]
        %v983 = vld [vmem:[%s951 + $0x7c] sm:$0xf]
        %v984 = vld [vmem:[%s951 + $0x80] sm:$0xf]
        %v985 = vld [vmem:[%s951 + $0x84] sm:$0xf]
        %v986 = vld [vmem:[%s951 + $0x88] sm:$0xf]
        %v987 = vld [vmem:[%s951 + $0x8c] sm:$0xf]
        %v988 = vld [vmem:[%s951 + $0x90] sm:$0xf]
        %v989 = vld [vmem:[%s951 + $0x94] sm:$0xf]
        %v990 = vld [vmem:[%s951 + $0x98] sm:$0xf]
        %v991 = vld [vmem:[%s951 + $0x9c] sm:$0xf]
        %v992 = vld [vmem:[%s951 + $0xa0] sm:$0xf]
        %v993 = vld [vmem:[%s951 + $0xa4] sm:$0xf]
        %v994 = vld [vmem:[%s951 + $0xa8] sm:$0xf]
        %v995 = vld [vmem:[%s951 + $0xac] sm:$0xf]
        %v996 = vld [vmem:[%s951 + $0xb0] sm:$0xf]
        %v997 = vld [vmem:[%s951 + $0xb4] sm:$0xf]
        %v998 = vld [vmem:[%s951 + $0xb8] sm:$0xf]
        %v999 = vld [vmem:[%s951 + $0xbc] sm:$0xf]
        %s1000 = scalar_lea.vmem %s4, 1
        %v1001 = vld [vmem:[%s1000] sm:$0x1]
        %v1003 = vlaneseq
        %v1004 = vshrl.u32 %v1003, 7
        %v1005 = vsub.s32 0, %v1004
        %v1006 = vrot.slane %v1001, %v1005
        %v1056 = vunpack.c.l.b16 %v952
        %v1057 = vunpack.c.l.b16 %v953
        %v1058 = vunpack.c.l.b16 %v954
        %v1059 = vunpack.c.l.b16 %v955
        %v1060 = vunpack.c.l.b16 %v956
        %v1061 = vunpack.c.l.b16 %v957
        %v1062 = vunpack.c.l.b16 %v958
        %v1063 = vunpack.c.l.b16 %v959
        %v1064 = vunpack.c.l.b16 %v960
        %v1065 = vunpack.c.l.b16 %v961
        %v1066 = vunpack.c.l.b16 %v962
        %v1067 = vunpack.c.l.b16 %v963
        %v1068 = vunpack.c.l.b16 %v964
        %v1069 = vunpack.c.l.b16 %v965
        %v1070 = vunpack.c.l.b16 %v966
        %v1071 = vunpack.c.l.b16 %v967
        %v1072 = vunpack.c.l.b16 %v968
        %v1073 = vunpack.c.l.b16 %v969
        %v1074 = vunpack.c.l.b16 %v970
        %v1075 = vunpack.c.l.b16 %v971
        %v1076 = vunpack.c.l.b16 %v972
        %v1077 = vunpack.c.l.b16 %v973
        %v1078 = vunpack.c.l.b16 %v974
        %v1079 = vunpack.c.l.b16 %v975
        %v1080 = vunpack.c.l.b16 %v976
        %v1081 = vunpack.c.l.b16 %v977
        %v1082 = vunpack.c.l.b16 %v978
        %v1083 = vunpack.c.l.b16 %v979
        %v1084 = vunpack.c.l.b16 %v980
        %v1085 = vunpack.c.l.b16 %v981
        %v1086 = vunpack.c.l.b16 %v982
        %v1087 = vunpack.c.l.b16 %v983
        %v1088 = vunpack.c.l.b16 %v984
        %v1089 = vunpack.c.l.b16 %v985
        %v1090 = vunpack.c.l.b16 %v986
        %v1091 = vunpack.c.l.b16 %v987
        %v1092 = vunpack.c.l.b16 %v988
        %v1093 = vunpack.c.l.b16 %v989
        %v1094 = vunpack.c.l.b16 %v990
        %v1095 = vunpack.c.l.b16 %v991
        %v1096 = vunpack.c.l.b16 %v992
        %v1097 = vunpack.c.l.b16 %v993
        %v1098 = vunpack.c.l.b16 %v994
        %v1099 = vunpack.c.l.b16 %v995
        %v1100 = vunpack.c.l.b16 %v996
        %v1101 = vunpack.c.l.b16 %v997
        %v1102 = vunpack.c.l.b16 %v998
        %v1103 = vunpack.c.l.b16 %v999
        %v1104 = vpack.c.b16 %v1057, %v1056
        %v1105 = vpack.c.b16 %v1059, %v1058
        %v1106 = vpack.c.b16 %v1061, %v1060
        %v1107 = vpack.c.b16 %v1063, %v1062
        %v1108 = vpack.c.b16 %v1065, %v1064
        %v1109 = vpack.c.b16 %v1067, %v1066
        %v1110 = vpack.c.b16 %v1069, %v1068
        %v1111 = vpack.c.b16 %v1071, %v1070
        %v1112 = vpack.c.b16 %v1073, %v1072
        %v1113 = vpack.c.b16 %v1075, %v1074
        %v1114 = vpack.c.b16 %v1077, %v1076
        %v1115 = vpack.c.b16 %v1079, %v1078
        %v1116 = vpack.c.b16 %v1081, %v1080
        %v1117 = vpack.c.b16 %v1083, %v1082
        %v1118 = vpack.c.b16 %v1085, %v1084
        %v1119 = vpack.c.b16 %v1087, %v1086
        %v1120 = vpack.c.b16 %v1089, %v1088
        %v1121 = vpack.c.b16 %v1091, %v1090
        %v1122 = vpack.c.b16 %v1093, %v1092
        %v1123 = vpack.c.b16 %v1095, %v1094
        %v1124 = vpack.c.b16 %v1097, %v1096
        %v1125 = vpack.c.b16 %v1099, %v1098
        %v1126 = vpack.c.b16 %v1101, %v1100
        %v1127 = vpack.c.b16 %v1103, %v1102
        %1152 = vmatprep.subr.bf16.mxu0 0
        %1153 = vmatpush1.bf16.msra.mxu0 %v1104
        %1154 = vmatprep.subr.bf16.mxu0 0
        %1155 = vmatpush1.bf16.msra.mxu0 %v1105
        %1156 = vmatprep.subr.bf16.mxu0 0
        %1157 = vmatpush1.bf16.msra.mxu0 %v1106
        %1158 = vmatprep.subr.bf16.mxu0 0
        %1159 = vmatpush1.bf16.msra.mxu0 %v1107
        %1160 = vmatprep.subr.bf16.mxu0 0
        %1161 = vmatpush1.bf16.msra.mxu0 %v1108
        %1162 = vmatprep.subr.bf16.mxu0 0
        %1163 = vmatpush1.bf16.msra.mxu0 %v1109
        %1164 = vmatprep.subr.bf16.mxu0 0
        %1165 = vmatpush1.bf16.msra.mxu0 %v1110
        %1166 = vmatprep.subr.bf16.mxu0 0
        %1167 = vmatpush1.bf16.msra.mxu0 %v1111
        %1168 = vmatprep.subr.bf16.mxu0 0
        %1169 = vmatpush1.bf16.msra.mxu0 %v1112
        %1170 = vmatprep.subr.bf16.mxu0 0
        %1171 = vmatpush1.bf16.msra.mxu0 %v1113
        %1172 = vmatprep.subr.bf16.mxu0 0
        %1173 = vmatpush1.bf16.msra.mxu0 %v1114
        %1174 = vmatprep.subr.bf16.mxu0 0
        %1175 = vmatpush1.bf16.msra.mxu0 %v1115
        %1176 = vmatprep.subr.bf16.mxu0 0
        %1177 = vmatpush1.bf16.msra.mxu0 %v1116
        %1178 = vmatprep.subr.bf16.mxu0 0
        %1179 = vmatpush1.bf16.msra.mxu0 %v1117
        %1180 = vmatprep.subr.bf16.mxu0 0
        %1181 = vmatpush1.bf16.msra.mxu0 %v1118
        %1182 = vmatprep.subr.bf16.mxu0 0
        %1183 = vmatpush1.bf16.msra.mxu0 %v1119
        %1184 = vmatprep.mubr.bf16.mxu0 %v946
        %1185 = vmatmul.mubr.bf16.gmra.mrb[0].mxu0 %v945
        %v1186 = vpop.f32.mrb[0].mxu0
        %v1187 = vadd.f32 %v1006, %v1186
        %v1188 = vpop.f32.mrb[0].mxu0
        %v1189 = vpop.f32.mrb[0].mxu0
        %v1190 = vadd.f32 %v1006, %v1189
        %v1191 = vpop.f32.mrb[0].mxu0
        %1192 = vmatprep.mubr.bf16.mxu0 %v949
        %1193 = vmatmul.mubr.bf16.gmra.mrb[0].mxu0 %v948
        %v1194 = vpop.f32.mrb[0].mxu0
        %v1195 = vadd.f32 %v1006, %v1194
        %v1196 = vpop.f32.mrb[0].mxu0
        %v1197 = vpop.f32.mrb[0].mxu0
        %v1198 = vadd.f32 %v1006, %v1197
        %v1199 = vpop.f32.mrb[0].mxu0
        %1200 = vdwg.mxu0
        %1201 = vmatprep.subr.bf16.mxu0 0
        %1202 = vmatpush1.bf16.msra.mxu0 %v1120
        %1203 = vmatprep.subr.bf16.mxu0 0
        %1204 = vmatpush1.bf16.msra.mxu0 %v1121
        %1205 = vmatprep.subr.bf16.mxu0 0
        %1206 = vmatpush1.bf16.msra.mxu0 %v1122
        %1207 = vmatprep.subr.bf16.mxu0 0
        %1208 = vmatpush1.bf16.msra.mxu0 %v1123
        %1209 = vmatprep.subr.bf16.mxu0 0
        %1210 = vmatpush1.bf16.msra.mxu0 %v1124
        %1211 = vmatprep.subr.bf16.mxu0 0
        %1212 = vmatpush1.bf16.msra.mxu0 %v1125
        %1213 = vmatprep.subr.bf16.mxu0 0
        %1214 = vmatpush1.bf16.msra.mxu0 %v1126
        %1215 = vmatprep.subr.bf16.mxu0 0
        %1216 = vmatpush1.bf16.msra.mxu0 %v1127
        %1217 = vmatprep.subr.bf16.mxu0 0
        %1218 = vmatpush1.bf16.msra.mxu0 0
        %1219 = vmatprep.subr.bf16.mxu0 0
        %1220 = vmatpush1.bf16.msra.mxu0 0
        %1221 = vmatprep.subr.bf16.mxu0 0
        %1222 = vmatpush1.bf16.msra.mxu0 0
        %1223 = vmatprep.subr.bf16.mxu0 0
        %1224 = vmatpush1.bf16.msra.mxu0 0
        %1225 = vmatprep.subr.bf16.mxu0 0
        %1226 = vmatpush1.bf16.msra.mxu0 0
        %1227 = vmatprep.subr.bf16.mxu0 0
        %1228 = vmatpush1.bf16.msra.mxu0 0
        %1229 = vmatprep.subr.bf16.mxu0 0
        %1230 = vmatpush1.bf16.msra.mxu0 0
        %1231 = vmatprep.subr.bf16.mxu0 0
        %1232 = vmatpush1.bf16.msra.mxu0 0
        %1233 = vmatprep.mubr.bf16.mxu0 0
        %1234 = vmatmul.mubr.bf16.gmra.mrb[0].mxu0 %v947
        %v1235 = vpop.f32.mrb[0].mxu0
        %v1236 = vadd.f32 %v1187, %v1235
        %v1237 = vpop.f32.mrb[0].mxu0
        %v1238 = vpop.f32.mrb[0].mxu0
        %v1239 = vadd.f32 %v1190, %v1238
        %v1240 = vpop.f32.mrb[0].mxu0
        %1241 = vmatprep.mubr.bf16.mxu0 0
        %1242 = vmatmul.mubr.bf16.gmra.mrb[0].mxu0 %v950
        %v1243 = vpop.f32.mrb[0].mxu0
        %v1244 = vadd.f32 %v1195, %v1243
        %v1245 = vpop.f32.mrb[0].mxu0
        %v1246 = vpop.f32.mrb[0].mxu0
        %v1247 = vadd.f32 %v1198, %v1246
        %v1248 = vpop.f32.mrb[0].mxu0
        %1249 = vdwg.mxu0
        %v1250 = vadd.f32 %v1236, %v518
        %v1251 = vadd.f32 %v1239, %v521
        %v1252 = vadd.f32 %v1244, %v526
        %v1253 = vadd.f32 %v1247, %v529
        %v1254 = vpack.c.bf16 %v1251, %v1250
        %v1255 = vpack.c.bf16 %v1253, %v1252
        %1256 = vst [vmem:[#allocation2 + $0x8] sm:$0xff] %v1254
        %1257 = vst [vmem:[#allocation2 + $0x20] sm:$0xff] %v1255
        %v1258 = vrot.slane %v1250, 7
        %v1259 = vrot.slane %v1251, 7
        %v1260 = vrot.slane %v1252, 7
        %v1261 = vrot.slane %v1253, 7
        %v1262 = vsel %vm540, %v1260, %v1261
        %v1263 = vsel %vm540, %v1259, %v1260
        %v1264 = vsel %vm540, %v1258, %v1259
        %v1265 = vsel %vm540, %v1261, %v1258
        %v1266 = vmul.f32 %v1265, %v380
        %v1267 = vmul.f32 %v1264, %v381
        %v1268 = vmul.f32 %v1263, %v382
        %v1269 = vmul.f32 %v1262, %v383
        %v1270 = vpack.c.bf16 %v1267, %v1266
        %v1271 = vpack.c.bf16 %v1269, %v1268
        %1272 = vst [vmem:[#allocation2] sm:$0xff] %v1270
        %1273 = vst [vmem:[#allocation2 + $0x18] sm:$0xff] %v1271
        %v1274 = vrot.slane %v1250, 1
        %v1275 = vrot.slane %v1251, 1
        %v1276 = vrot.slane %v1252, 1
        %v1277 = vrot.slane %v1253, 1
        %v1278 = vsel %vm557, %v1276, %v1277
        %v1279 = vsel %vm557, %v1275, %v1276
        %v1280 = vsel %vm557, %v1274, %v1275
        %v1281 = vsel %vm557, %v1277, %v1274
        %v1282 = vmul.f32 %v1280, %v392
        %v1283 = vmul.f32 %v1279, %v393
        %v1284 = vmul.f32 %v1278, %v394
        %v1285 = vmul.f32 %v1281, %v395
        %v1286 = vpack.c.bf16 %v1283, %v1282
        %v1287 = vpack.c.bf16 %v1285, %v1284
        %1288 = vst [vmem:[#allocation2 + $0x10] sm:$0xff] %v1286
        %1289 = vst [vmem:[#allocation2 + $0x28] sm:$0xff] %v1287
        %v1290 = vld [vmem:[#allocation2] sm:$0xff]
        %v1291 = vld [vmem:[#allocation2 + $0x8] sm:$0xff]
        %v1292 = vld [vmem:[#allocation2 + $0x10] sm:$0xff]
        %v1293 = vld [vmem:[#allocation2 + $0x18] sm:$0xff]
        %v1294 = vld [vmem:[#allocation2 + $0x20] sm:$0xff]
        %v1295 = vld [vmem:[#allocation2 + $0x28] sm:$0xff]
        %s1296 = scalar_lea.vmem [#allocation8], 384
        %v1297 = vld [vmem:[%s1296] sm:$0xf]
        %v1298 = vld [vmem:[%s1296 + $0x4] sm:$0xf]
        %v1299 = vld [vmem:[%s1296 + $0x8] sm:$0xf]
        %v1300 = vld [vmem:[%s1296 + $0xc] sm:$0xf]
        %v1301 = vld [vmem:[%s1296 + $0x10] sm:$0xf]
        %v1302 = vld [vmem:[%s1296 + $0x14] sm:$0xf]
        %v1303 = vld [vmem:[%s1296 + $0x18] sm:$0xf]
        %v1304 = vld [vmem:[%s1296 + $0x1c] sm:$0xf]
        %v1305 = vld [vmem:[%s1296 + $0x20] sm:$0xf]
        %v1306 = vld [vmem:[%s1296 + $0x24] sm:$0xf]
        %v1307 = vld [vmem:[%s1296 + $0x28] sm:$0xf]
        %v1308 = vld [vmem:[%s1296 + $0x2c] sm:$0xf]
        %v1309 = vld [vmem:[%s1296 + $0x30] sm:$0xf]
        %v1310 = vld [vmem:[%s1296 + $0x34] sm:$0xf]
        %v1311 = vld [vmem:[%s1296 + $0x38] sm:$0xf]
        %v1312 = vld [vmem:[%s1296 + $0x3c] sm:$0xf]
        %v1313 = vld [vmem:[%s1296 + $0x40] sm:$0xf]
        %v1314 = vld [vmem:[%s1296 + $0x44] sm:$0xf]
        %v1315 = vld [vmem:[%s1296 + $0x48] sm:$0xf]
        %v1316 = vld [vmem:[%s1296 + $0x4c] sm:$0xf]
        %v1317 = vld [vmem:[%s1296 + $0x50] sm:$0xf]
        %v1318 = vld [vmem:[%s1296 + $0x54] sm:$0xf]
        %v1319 = vld [vmem:[%s1296 + $0x58] sm:$0xf]
        %v1320 = vld [vmem:[%s1296 + $0x5c] sm:$0xf]
        %v1321 = vld [vmem:[%s1296 + $0x60] sm:$0xf]
        %v1322 = vld [vmem:[%s1296 + $0x64] sm:$0xf]
        %v1323 = vld [vmem:[%s1296 + $0x68] sm:$0xf]
        %v1324 = vld [vmem:[%s1296 + $0x6c] sm:$0xf]
        %v1325 = vld [vmem:[%s1296 + $0x70] sm:$0xf]
        %v1326 = vld [vmem:[%s1296 + $0x74] sm:$0xf]
        %v1327 = vld [vmem:[%s1296 + $0x78] sm:$0xf]
        %v1328 = vld [vmem:[%s1296 + $0x7c] sm:$0xf]
        %v1329 = vld [vmem:[%s1296 + $0x80] sm:$0xf]
        %v1330 = vld [vmem:[%s1296 + $0x84] sm:$0xf]
        %v1331 = vld [vmem:[%s1296 + $0x88] sm:$0xf]
        %v1332 = vld [vmem:[%s1296 + $0x8c] sm:$0xf]
        %v1333 = vld [vmem:[%s1296 + $0x90] sm:$0xf]
        %v1334 = vld [vmem:[%s1296 + $0x94] sm:$0xf]
        %v1335 = vld [vmem:[%s1296 + $0x98] sm:$0xf]
        %v1336 = vld [vmem:[%s1296 + $0x9c] sm:$0xf]
        %v1337 = vld [vmem:[%s1296 + $0xa0] sm:$0xf]
        %v1338 = vld [vmem:[%s1296 + $0xa4] sm:$0xf]
        %v1339 = vld [vmem:[%s1296 + $0xa8] sm:$0xf]
        %v1340 = vld [vmem:[%s1296 + $0xac] sm:$0xf]
        %v1341 = vld [vmem:[%s1296 + $0xb0] sm:$0xf]
        %v1342 = vld [vmem:[%s1296 + $0xb4] sm:$0xf]
        %v1343 = vld [vmem:[%s1296 + $0xb8] sm:$0xf]
        %v1344 = vld [vmem:[%s1296 + $0xbc] sm:$0xf]
        %s1345 = scalar_lea.vmem %s4, 2
        %v1346 = vld [vmem:[%s1345] sm:$0x1]
        %v1348 = vlaneseq
        %v1349 = vshrl.u32 %v1348, 7
        %v1350 = vsub.s32 0, %v1349
        %v1351 = vrot.slane %v1346, %v1350
        %v1401 = vunpack.c.l.b16 %v1297
        %v1402 = vunpack.c.l.b16 %v1298
        %v1403 = vunpack.c.l.b16 %v1299
        %v1404 = vunpack.c.l.b16 %v1300
        %v1405 = vunpack.c.l.b16 %v1301
        %v1406 = vunpack.c.l.b16 %v1302
        %v1407 = vunpack.c.l.b16 %v1303
        %v1408 = vunpack.c.l.b16 %v1304
        %v1409 = vunpack.c.l.b16 %v1305
        %v1410 = vunpack.c.l.b16 %v1306
        %v1411 = vunpack.c.l.b16 %v1307
        %v1412 = vunpack.c.l.b16 %v1308
        %v1413 = vunpack.c.l.b16 %v1309
        %v1414 = vunpack.c.l.b16 %v1310
        %v1415 = vunpack.c.l.b16 %v1311
        %v1416 = vunpack.c.l.b16 %v1312
        %v1417 = vunpack.c.l.b16 %v1313
        %v1418 = vunpack.c.l.b16 %v1314
        %v1419 = vunpack.c.l.b16 %v1315
        %v1420 = vunpack.c.l.b16 %v1316
        %v1421 = vunpack.c.l.b16 %v1317
        %v1422 = vunpack.c.l.b16 %v1318
        %v1423 = vunpack.c.l.b16 %v1319
        %v1424 = vunpack.c.l.b16 %v1320
        %v1425 = vunpack.c.l.b16 %v1321
        %v1426 = vunpack.c.l.b16 %v1322
        %v1427 = vunpack.c.l.b16 %v1323
        %v1428 = vunpack.c.l.b16 %v1324
        %v1429 = vunpack.c.l.b16 %v1325
        %v1430 = vunpack.c.l.b16 %v1326
        %v1431 = vunpack.c.l.b16 %v1327
        %v1432 = vunpack.c.l.b16 %v1328
        %v1433 = vunpack.c.l.b16 %v1329
        %v1434 = vunpack.c.l.b16 %v1330
        %v1435 = vunpack.c.l.b16 %v1331
        %v1436 = vunpack.c.l.b16 %v1332
        %v1437 = vunpack.c.l.b16 %v1333
        %v1438 = vunpack.c.l.b16 %v1334
        %v1439 = vunpack.c.l.b16 %v1335
        %v1440 = vunpack.c.l.b16 %v1336
        %v1441 = vunpack.c.l.b16 %v1337
        %v1442 = vunpack.c.l.b16 %v1338
        %v1443 = vunpack.c.l.b16 %v1339
        %v1444 = vunpack.c.l.b16 %v1340
        %v1445 = vunpack.c.l.b16 %v1341
        %v1446 = vunpack.c.l.b16 %v1342
        %v1447 = vunpack.c.l.b16 %v1343
        %v1448 = vunpack.c.l.b16 %v1344
        %v1449 = vpack.c.b16 %v1402, %v1401
        %v1450 = vpack.c.b16 %v1404, %v1403
        %v1451 = vpack.c.b16 %v1406, %v1405
        %v1452 = vpack.c.b16 %v1408, %v1407
        %v1453 = vpack.c.b16 %v1410, %v1409
        %v1454 = vpack.c.b16 %v1412, %v1411
        %v1455 = vpack.c.b16 %v1414, %v1413
        %v1456 = vpack.c.b16 %v1416, %v1415
        %v1457 = vpack.c.b16 %v1418, %v1417
        %v1458 = vpack.c.b16 %v1420, %v1419
        %v1459 = vpack.c.b16 %v1422, %v1421
        %v1460 = vpack.c.b16 %v1424, %v1423
        %v1461 = vpack.c.b16 %v1426, %v1425
        %v1462 = vpack.c.b16 %v1428, %v1427
        %v1463 = vpack.c.b16 %v1430, %v1429
        %v1464 = vpack.c.b16 %v1432, %v1431
        %v1465 = vpack.c.b16 %v1434, %v1433
        %v1466 = vpack.c.b16 %v1436, %v1435
        %v1467 = vpack.c.b16 %v1438, %v1437
        %v1468 = vpack.c.b16 %v1440, %v1439
        %v1469 = vpack.c.b16 %v1442, %v1441
        %v1470 = vpack.c.b16 %v1444, %v1443
        %v1471 = vpack.c.b16 %v1446, %v1445
        %v1472 = vpack.c.b16 %v1448, %v1447
        %1497 = vmatprep.subr.bf16.mxu0 0
        %1498 = vmatpush1.bf16.msra.mxu0 %v1449
        %1499 = vmatprep.subr.bf16.mxu0 0
        %1500 = vmatpush1.bf16.msra.mxu0 %v1450
        %1501 = vmatprep.subr.bf16.mxu0 0
        %1502 = vmatpush1.bf16.msra.mxu0 %v1451
        %1503 = vmatprep.subr.bf16.mxu0 0
        %1504 = vmatpush1.bf16.msra.mxu0 %v1452
        %1505 = vmatprep.subr.bf16.mxu0 0
        %1506 = vmatpush1.bf16.msra.mxu0 %v1453
        %1507 = vmatprep.subr.bf16.mxu0 0
        %1508 = vmatpush1.bf16.msra.mxu0 %v1454
        %1509 = vmatprep.subr.bf16.mxu0 0
        %1510 = vmatpush1.bf16.msra.mxu0 %v1455
        %1511 = vmatprep.subr.bf16.mxu0 0
        %1512 = vmatpush1.bf16.msra.mxu0 %v1456
        %1513 = vmatprep.subr.bf16.mxu0 0
        %1514 = vmatpush1.bf16.msra.mxu0 %v1457
        %1515 = vmatprep.subr.bf16.mxu0 0
        %1516 = vmatpush1.bf16.msra.mxu0 %v1458
        %1517 = vmatprep.subr.bf16.mxu0 0
        %1518 = vmatpush1.bf16.msra.mxu0 %v1459
        %1519 = vmatprep.subr.bf16.mxu0 0
        %1520 = vmatpush1.bf16.msra.mxu0 %v1460
        %1521 = vmatprep.subr.bf16.mxu0 0
        %1522 = vmatpush1.bf16.msra.mxu0 %v1461
        %1523 = vmatprep.subr.bf16.mxu0 0
        %1524 = vmatpush1.bf16.msra.mxu0 %v1462
        %1525 = vmatprep.subr.bf16.mxu0 0
        %1526 = vmatpush1.bf16.msra.mxu0 %v1463
        %1527 = vmatprep.subr.bf16.mxu0 0
        %1528 = vmatpush1.bf16.msra.mxu0 %v1464
        %1529 = vmatprep.mubr.bf16.mxu0 %v1291
        %1530 = vmatmul.mubr.bf16.gmra.mrb[0].mxu0 %v1290
        %v1531 = vpop.f32.mrb[0].mxu0
        %v1532 = vadd.f32 %v1351, %v1531
        %v1533 = vpop.f32.mrb[0].mxu0
        %v1534 = vpop.f32.mrb[0].mxu0
        %v1535 = vadd.f32 %v1351, %v1534
        %v1536 = vpop.f32.mrb[0].mxu0
        %1537 = vmatprep.mubr.bf16.mxu0 %v1294
        %1538 = vmatmul.mubr.bf16.gmra.mrb[0].mxu0 %v1293
        %v1539 = vpop.f32.mrb[0].mxu0
        %v1540 = vadd.f32 %v1351, %v1539
        %v1541 = vpop.f32.mrb[0].mxu0
        %v1542 = vpop.f32.mrb[0].mxu0
        %v1543 = vadd.f32 %v1351, %v1542
        %v1544 = vpop.f32.mrb[0].mxu0
        %1545 = vdwg.mxu0
        %1546 = vmatprep.subr.bf16.mxu0 0
        %1547 = vmatpush1.bf16.msra.mxu0 %v1465
        %1548 = vmatprep.subr.bf16.mxu0 0
        %1549 = vmatpush1.bf16.msra.mxu0 %v1466
        %1550 = vmatprep.subr.bf16.mxu0 0
        %1551 = vmatpush1.bf16.msra.mxu0 %v1467
        %1552 = vmatprep.subr.bf16.mxu0 0
        %1553 = vmatpush1.bf16.msra.mxu0 %v1468
        %1554 = vmatprep.subr.bf16.mxu0 0
        %1555 = vmatpush1.bf16.msra.mxu0 %v1469
        %1556 = vmatprep.subr.bf16.mxu0 0
        %1557 = vmatpush1.bf16.msra.mxu0 %v1470
        %1558 = vmatprep.subr.bf16.mxu0 0
        %1559 = vmatpush1.bf16.msra.mxu0 %v1471
        %1560 = vmatprep.subr.bf16.mxu0 0
        %1561 = vmatpush1.bf16.msra.mxu0 %v1472
        %1562 = vmatprep.subr.bf16.mxu0 0
        %1563 = vmatpush1.bf16.msra.mxu0 0
        %1564 = vmatprep.subr.bf16.mxu0 0
        %1565 = vmatpush1.bf16.msra.mxu0 0
        %1566 = vmatprep.subr.bf16.mxu0 0
        %1567 = vmatpush1.bf16.msra.mxu0 0
        %1568 = vmatprep.subr.bf16.mxu0 0
        %1569 = vmatpush1.bf16.msra.mxu0 0
        %1570 = vmatprep.subr.bf16.mxu0 0
        %1571 = vmatpush1.bf16.msra.mxu0 0
        %1572 = vmatprep.subr.bf16.mxu0 0
        %1573 = vmatpush1.bf16.msra.mxu0 0
        %1574 = vmatprep.subr.bf16.mxu0 0
        %1575 = vmatpush1.bf16.msra.mxu0 0
        %1576 = vmatprep.subr.bf16.mxu0 0
        %1577 = vmatpush1.bf16.msra.mxu0 0
        %1578 = vmatprep.mubr.bf16.mxu0 0
        %1579 = vmatmul.mubr.bf16.gmra.mrb[0].mxu0 %v1292
        %v1580 = vpop.f32.mrb[0].mxu0
        %v1581 = vadd.f32 %v1532, %v1580
        %v1582 = vpop.f32.mrb[0].mxu0
        %v1583 = vpop.f32.mrb[0].mxu0
        %v1584 = vadd.f32 %v1535, %v1583
        %v1585 = vpop.f32.mrb[0].mxu0
        %1586 = vmatprep.mubr.bf16.mxu0 0
        %1587 = vmatmul.mubr.bf16.gmra.mrb[0].mxu0 %v1295
        %v1588 = vpop.f32.mrb[0].mxu0
        %v1589 = vadd.f32 %v1540, %v1588
        %v1590 = vpop.f32.mrb[0].mxu0
        %v1591 = vpop.f32.mrb[0].mxu0
        %v1592 = vadd.f32 %v1543, %v1591
        %v1593 = vpop.f32.mrb[0].mxu0
        %1594 = vdwg.mxu0
        %v1595 = vmul.f32 %v1581, %v1581
        %v1596 = vmul.f32 %v1584, %v1584
        %v1597 = vmul.f32 %v1589, %v1589
        %v1598 = vmul.f32 %v1592, %v1592
        %v1599 = vmul.f32 %v1581, %v1595
        %v1600 = vmul.f32 %v1584, %v1596
        %v1601 = vmul.f32 %v1589, %v1597
        %v1602 = vmul.f32 %v1592, %v1598
        %v1603 = vmul.f32 %v1599, 0.044715
        %v1604 = vmul.f32 %v1600, 0.044715
        %v1605 = vmul.f32 %v1601, 0.044715
        %v1606 = vmul.f32 %v1602, 0.044715
        %v1607 = vadd.f32 %v1581, %v1603
        %v1608 = vadd.f32 %v1584, %v1604
        %v1609 = vadd.f32 %v1589, %v1605
        %v1610 = vadd.f32 %v1592, %v1606
        %v1611 = vmul.f32 %v1607, 0.7978846
        %v1612 = vmul.f32 %v1608, 0.7978846
        %v1613 = vmul.f32 %v1609, 0.7978846
        %v1614 = vmul.f32 %v1610, 0.7978846
        %v1615 = vtanh.pop %v1611
        %v1616 = vtanh.pop %v1612
        %v1617 = vtanh.pop %v1613
        %v1618 = vtanh.pop %v1614
        %v1619 = vadd.f32 %v1615, 1.0
        %v1620 = vadd.f32 %v1616, 1.0
        %v1621 = vadd.f32 %v1617, 1.0
        %v1622 = vadd.f32 %v1618, 1.0
        %v1623 = vmul.f32 %v1619, 0.5
        %v1624 = vmul.f32 %v1620, 0.5
        %v1625 = vmul.f32 %v1621, 0.5
        %v1626 = vmul.f32 %v1622, 0.5
        %v1627 = vmul.f32 %v1581, %v1623
        %v1628 = vmul.f32 %v1584, %v1624
        %v1629 = vmul.f32 %v1589, %v1625
        %v1630 = vmul.f32 %v1592, %v1626
        %v1631 = vpack.c.bf16 %v1628, %v1627
        %v1632 = vpack.c.bf16 %v1630, %v1629
        %1633 = vst [vmem:[#allocation2 + $0x8] sm:$0xff] %v1631
        %1634 = vst [vmem:[#allocation2 + $0x20] sm:$0xff] %v1632
        %v1635 = vrot.slane %v1627, 7
        %v1636 = vrot.slane %v1628, 7
        %v1637 = vrot.slane %v1629, 7
        %v1638 = vrot.slane %v1630, 7
        %v1639 = vsel %vm540, %v1637, %v1638
        %v1640 = vsel %vm540, %v1636, %v1637
        %v1641 = vsel %vm540, %v1635, %v1636
        %v1642 = vsel %vm540, %v1638, %v1635
        %v1643 = vmul.f32 %v1642, %v380
        %v1644 = vmul.f32 %v1641, %v381
        %v1645 = vmul.f32 %v1640, %v382
        %v1646 = vmul.f32 %v1639, %v383
        %v1647 = vpack.c.bf16 %v1644, %v1643
        %v1648 = vpack.c.bf16 %v1646, %v1645
        %1649 = vst [vmem:[#allocation2] sm:$0xff] %v1647
        %1650 = vst [vmem:[#allocation2 + $0x18] sm:$0xff] %v1648
        %v1651 = vrot.slane %v1627, 1
        %v1652 = vrot.slane %v1628, 1
        %v1653 = vrot.slane %v1629, 1
        %v1654 = vrot.slane %v1630, 1
        %v1655 = vsel %vm557, %v1653, %v1654
        %v1656 = vsel %vm557, %v1652, %v1653
        %v1657 = vsel %vm557, %v1651, %v1652
        %v1658 = vsel %vm557, %v1654, %v1651
        %v1659 = vmul.f32 %v1657, %v392
        %v1660 = vmul.f32 %v1656, %v393
        %v1661 = vmul.f32 %v1655, %v394
        %v1662 = vmul.f32 %v1658, %v395
        %v1663 = vpack.c.bf16 %v1660, %v1659
        %v1664 = vpack.c.bf16 %v1662, %v1661
        %1665 = vst [vmem:[#allocation2 + $0x10] sm:$0xff] %v1663
        %1666 = vst [vmem:[#allocation2 + $0x28] sm:$0xff] %v1664
        %v1667 = vld [vmem:[#allocation2] sm:$0xff]
        %v1668 = vld [vmem:[#allocation2 + $0x8] sm:$0xff]
        %v1669 = vld [vmem:[#allocation2 + $0x10] sm:$0xff]
        %v1670 = vld [vmem:[#allocation2 + $0x18] sm:$0xff]
        %v1671 = vld [vmem:[#allocation2 + $0x20] sm:$0xff]
        %v1672 = vld [vmem:[#allocation2 + $0x28] sm:$0xff]
        %s1673 = scalar_lea.vmem [#allocation8], 576
        %v1674 = vld [vmem:[%s1673] sm:$0xf]
        %v1675 = vld [vmem:[%s1673 + $0x4] sm:$0xf]
        %v1676 = vld [vmem:[%s1673 + $0x8] sm:$0xf]
        %v1677 = vld [vmem:[%s1673 + $0xc] sm:$0xf]
        %v1678 = vld [vmem:[%s1673 + $0x10] sm:$0xf]
        %v1679 = vld [vmem:[%s1673 + $0x14] sm:$0xf]
        %v1680 = vld [vmem:[%s1673 + $0x18] sm:$0xf]
        %v1681 = vld [vmem:[%s1673 + $0x1c] sm:$0xf]
        %v1682 = vld [vmem:[%s1673 + $0x20] sm:$0xf]
        %v1683 = vld [vmem:[%s1673 + $0x24] sm:$0xf]
        %v1684 = vld [vmem:[%s1673 + $0x28] sm:$0xf]
        %v1685 = vld [vmem:[%s1673 + $0x2c] sm:$0xf]
        %v1686 = vld [vmem:[%s1673 + $0x30] sm:$0xf]
        %v1687 = vld [vmem:[%s1673 + $0x34] sm:$0xf]
        %v1688 = vld [vmem:[%s1673 + $0x38] sm:$0xf]
        %v1689 = vld [vmem:[%s1673 + $0x3c] sm:$0xf]
        %v1690 = vld [vmem:[%s1673 + $0x40] sm:$0xf]
        %v1691 = vld [vmem:[%s1673 + $0x44] sm:$0xf]
        %v1692 = vld [vmem:[%s1673 + $0x48] sm:$0xf]
        %v1693 = vld [vmem:[%s1673 + $0x4c] sm:$0xf]
        %v1694 = vld [vmem:[%s1673 + $0x50] sm:$0xf]
        %v1695 = vld [vmem:[%s1673 + $0x54] sm:$0xf]
        %v1696 = vld [vmem:[%s1673 + $0x58] sm:$0xf]
        %v1697 = vld [vmem:[%s1673 + $0x5c] sm:$0xf]
        %v1698 = vld [vmem:[%s1673 + $0x60] sm:$0xf]
        %v1699 = vld [vmem:[%s1673 + $0x64] sm:$0xf]
        %v1700 = vld [vmem:[%s1673 + $0x68] sm:$0xf]
        %v1701 = vld [vmem:[%s1673 + $0x6c] sm:$0xf]
        %v1702 = vld [vmem:[%s1673 + $0x70] sm:$0xf]
        %v1703 = vld [vmem:[%s1673 + $0x74] sm:$0xf]
        %v1704 = vld [vmem:[%s1673 + $0x78] sm:$0xf]
        %v1705 = vld [vmem:[%s1673 + $0x7c] sm:$0xf]
        %v1706 = vld [vmem:[%s1673 + $0x80] sm:$0xf]
        %v1707 = vld [vmem:[%s1673 + $0x84] sm:$0xf]
        %v1708 = vld [vmem:[%s1673 + $0x88] sm:$0xf]
        %v1709 = vld [vmem:[%s1673 + $0x8c] sm:$0xf]
        %v1710 = vld [vmem:[%s1673 + $0x90] sm:$0xf]
        %v1711 = vld [vmem:[%s1673 + $0x94] sm:$0xf]
        %v1712 = vld [vmem:[%s1673 + $0x98] sm:$0xf]
        %v1713 = vld [vmem:[%s1673 + $0x9c] sm:$0xf]
        %v1714 = vld [vmem:[%s1673 + $0xa0] sm:$0xf]
        %v1715 = vld [vmem:[%s1673 + $0xa4] sm:$0xf]
        %v1716 = vld [vmem:[%s1673 + $0xa8] sm:$0xf]
        %v1717 = vld [vmem:[%s1673 + $0xac] sm:$0xf]
        %v1718 = vld [vmem:[%s1673 + $0xb0] sm:$0xf]
        %v1719 = vld [vmem:[%s1673 + $0xb4] sm:$0xf]
        %v1720 = vld [vmem:[%s1673 + $0xb8] sm:$0xf]
        %v1721 = vld [vmem:[%s1673 + $0xbc] sm:$0xf]
        %s1722 = scalar_lea.vmem %s4, 3
        %v1723 = vld [vmem:[%s1722] sm:$0x1]
        %v1725 = vlaneseq
        %v1726 = vshrl.u32 %v1725, 7
        %v1727 = vsub.s32 0, %v1726
        %v1728 = vrot.slane %v1723, %v1727
        %v1778 = vunpack.c.l.b16 %v1674
        %v1779 = vunpack.c.l.b16 %v1675
        %v1780 = vunpack.c.l.b16 %v1676
        %v1781 = vunpack.c.l.b16 %v1677
        %v1782 = vunpack.c.l.b16 %v1678
        %v1783 = vunpack.c.l.b16 %v1679
        %v1784 = vunpack.c.l.b16 %v1680
        %v1785 = vunpack.c.l.b16 %v1681
        %v1786 = vunpack.c.l.b16 %v1682
        %v1787 = vunpack.c.l.b16 %v1683
        %v1788 = vunpack.c.l.b16 %v1684
        %v1789 = vunpack.c.l.b16 %v1685
        %v1790 = vunpack.c.l.b16 %v1686
        %v1791 = vunpack.c.l.b16 %v1687
        %v1792 = vunpack.c.l.b16 %v1688
        %v1793 = vunpack.c.l.b16 %v1689
        %v1794 = vunpack.c.l.b16 %v1690
        %v1795 = vunpack.c.l.b16 %v1691
        %v1796 = vunpack.c.l.b16 %v1692
        %v1797 = vunpack.c.l.b16 %v1693
        %v1798 = vunpack.c.l.b16 %v1694
        %v1799 = vunpack.c.l.b16 %v1695
        %v1800 = vunpack.c.l.b16 %v1696
        %v1801 = vunpack.c.l.b16 %v1697
        %v1802 = vunpack.c.l.b16 %v1698
        %v1803 = vunpack.c.l.b16 %v1699
        %v1804 = vunpack.c.l.b16 %v1700
        %v1805 = vunpack.c.l.b16 %v1701
        %v1806 = vunpack.c.l.b16 %v1702
        %v1807 = vunpack.c.l.b16 %v1703
        %v1808 = vunpack.c.l.b16 %v1704
        %v1809 = vunpack.c.l.b16 %v1705
        %v1810 = vunpack.c.l.b16 %v1706
        %v1811 = vunpack.c.l.b16 %v1707
        %v1812 = vunpack.c.l.b16 %v1708
        %v1813 = vunpack.c.l.b16 %v1709
        %v1814 = vunpack.c.l.b16 %v1710
        %v1815 = vunpack.c.l.b16 %v1711
        %v1816 = vunpack.c.l.b16 %v1712
        %v1817 = vunpack.c.l.b16 %v1713
        %v1818 = vunpack.c.l.b16 %v1714
        %v1819 = vunpack.c.l.b16 %v1715
        %v1820 = vunpack.c.l.b16 %v1716
        %v1821 = vunpack.c.l.b16 %v1717
        %v1822 = vunpack.c.l.b16 %v1718
        %v1823 = vunpack.c.l.b16 %v1719
        %v1824 = vunpack.c.l.b16 %v1720
        %v1825 = vunpack.c.l.b16 %v1721
        %v1826 = vpack.c.b16 %v1779, %v1778
        %v1827 = vpack.c.b16 %v1781, %v1780
        %v1828 = vpack.c.b16 %v1783, %v1782
        %v1829 = vpack.c.b16 %v1785, %v1784
        %v1830 = vpack.c.b16 %v1787, %v1786
        %v1831 = vpack.c.b16 %v1789, %v1788
        %v1832 = vpack.c.b16 %v1791, %v1790
        %v1833 = vpack.c.b16 %v1793, %v1792
        %v1834 = vpack.c.b16 %v1795, %v1794
        %v1835 = vpack.c.b16 %v1797, %v1796
        %v1836 = vpack.c.b16 %v1799, %v1798
        %v1837 = vpack.c.b16 %v1801, %v1800
        %v1838 = vpack.c.b16 %v1803, %v1802
        %v1839 = vpack.c.b16 %v1805, %v1804
        %v1840 = vpack.c.b16 %v1807, %v1806
        %v1841 = vpack.c.b16 %v1809, %v1808
        %v1842 = vpack.c.b16 %v1811, %v1810
        %v1843 = vpack.c.b16 %v1813, %v1812
        %v1844 = vpack.c.b16 %v1815, %v1814
        %v1845 = vpack.c.b16 %v1817, %v1816
        %v1846 = vpack.c.b16 %v1819, %v1818
        %v1847 = vpack.c.b16 %v1821, %v1820
        %v1848 = vpack.c.b16 %v1823, %v1822
        %v1849 = vpack.c.b16 %v1825, %v1824
        %1874 = vmatprep.subr.bf16.mxu0 0
        %1875 = vmatpush1.bf16.msra.mxu0 %v1826
        %1876 = vmatprep.subr.bf16.mxu0 0
        %1877 = vmatpush1.bf16.msra.mxu0 %v1827
        %1878 = vmatprep.subr.bf16.mxu0 0
        %1879 = vmatpush1.bf16.msra.mxu0 %v1828
        %1880 = vmatprep.subr.bf16.mxu0 0
        %1881 = vmatpush1.bf16.msra.mxu0 %v1829
        %1882 = vmatprep.subr.bf16.mxu0 0
        %1883 = vmatpush1.bf16.msra.mxu0 %v1830
        %1884 = vmatprep.subr.bf16.mxu0 0
        %1885 = vmatpush1.bf16.msra.mxu0 %v1831
        %1886 = vmatprep.subr.bf16.mxu0 0
        %1887 = vmatpush1.bf16.msra.mxu0 %v1832
        %1888 = vmatprep.subr.bf16.mxu0 0
        %1889 = vmatpush1.bf16.msra.mxu0 %v1833
        %1890 = vmatprep.subr.bf16.mxu0 0
        %1891 = vmatpush1.bf16.msra.mxu0 %v1834
        %1892 = vmatprep.subr.bf16.mxu0 0
        %1893 = vmatpush1.bf16.msra.mxu0 %v1835
        %1894 = vmatprep.subr.bf16.mxu0 0
        %1895 = vmatpush1.bf16.msra.mxu0 %v1836
        %1896 = vmatprep.subr.bf16.mxu0 0
        %1897 = vmatpush1.bf16.msra.mxu0 %v1837
        %1898 = vmatprep.subr.bf16.mxu0 0
        %1899 = vmatpush1.bf16.msra.mxu0 %v1838
        %1900 = vmatprep.subr.bf16.mxu0 0
        %1901 = vmatpush1.bf16.msra.mxu0 %v1839
        %1902 = vmatprep.subr.bf16.mxu0 0
        %1903 = vmatpush1.bf16.msra.mxu0 %v1840
        %1904 = vmatprep.subr.bf16.mxu0 0
        %1905 = vmatpush1.bf16.msra.mxu0 %v1841
        %1906 = vmatprep.mubr.bf16.mxu0 %v1668
        %1907 = vmatmul.mubr.bf16.gmra.mrb[0].mxu0 %v1667
        %v1908 = vpop.f32.mrb[0].mxu0
        %v1909 = vpop.f32.mrb[0].mxu0
        %v1910 = vpop.f32.mrb[0].mxu0
        %v1911 = vadd.f32 %v1728, %v1910
        %v1912 = vpop.f32.mrb[0].mxu0
        %1913 = vmatprep.mubr.bf16.mxu0 %v1671
        %1914 = vmatmul.mubr.bf16.gmra.mrb[0].mxu0 %v1670
        %v1915 = vpop.f32.mrb[0].mxu0
        %v1916 = vadd.f32 %v1728, %v1915
        %v1917 = vpop.f32.mrb[0].mxu0
        %v1918 = vpop.f32.mrb[0].mxu0
        %v1919 = vpop.f32.mrb[0].mxu0
        %1920 = vdwg.mxu0
        %1921 = vmatprep.subr.bf16.mxu0 0
        %1922 = vmatpush1.bf16.msra.mxu0 %v1842
        %1923 = vmatprep.subr.bf16.mxu0 0
        %1924 = vmatpush1.bf16.msra.mxu0 %v1843
        %1925 = vmatprep.subr.bf16.mxu0 0
        %1926 = vmatpush1.bf16.msra.mxu0 %v1844
        %1927 = vmatprep.subr.bf16.mxu0 0
        %1928 = vmatpush1.bf16.msra.mxu0 %v1845
        %1929 = vmatprep.subr.bf16.mxu0 0
        %1930 = vmatpush1.bf16.msra.mxu0 %v1846
        %1931 = vmatprep.subr.bf16.mxu0 0
        %1932 = vmatpush1.bf16.msra.mxu0 %v1847
        %1933 = vmatprep.subr.bf16.mxu0 0
        %1934 = vmatpush1.bf16.msra.mxu0 %v1848
        %1935 = vmatprep.subr.bf16.mxu0 0
        %1936 = vmatpush1.bf16.msra.mxu0 %v1849
        %1937 = vmatprep.subr.bf16.mxu0 0
        %1938 = vmatpush1.bf16.msra.mxu0 0
        %1939 = vmatprep.subr.bf16.mxu0 0
        %1940 = vmatpush1.bf16.msra.mxu0 0
        %1941 = vmatprep.subr.bf16.mxu0 0
        %1942 = vmatpush1.bf16.msra.mxu0 0
        %1943 = vmatprep.subr.bf16.mxu0 0
        %1944 = vmatpush1.bf16.msra.mxu0 0
        %1945 = vmatprep.subr.bf16.mxu0 0
        %1946 = vmatpush1.bf16.msra.mxu0 0
        %1947 = vmatprep.subr.bf16.mxu0 0
        %1948 = vmatpush1.bf16.msra.mxu0 0
        %1949 = vmatprep.subr.bf16.mxu0 0
        %1950 = vmatpush1.bf16.msra.mxu0 0
        %1951 = vmatprep.subr.bf16.mxu0 0
        %1952 = vmatpush1.bf16.msra.mxu0 0
        %1953 = vmatprep.mubr.bf16.mxu0 0
        %1954 = vmatmul.mubr.bf16.gmra.mrb[0].mxu0 %v1669
        %v1955 = vpop.f32.mrb[0].mxu0
        %v1956 = vpop.f32.mrb[0].mxu0
        %v1957 = vpop.f32.mrb[0].mxu0
        %v1958 = vadd.f32 %v1911, %v1957
        %v1959 = vpop.f32.mrb[0].mxu0
        %1960 = vmatprep.mubr.bf16.mxu0 0
        %1961 = vmatmul.mubr.bf16.gmra.mrb[0].mxu0 %v1672
        %v1962 = vpop.f32.mrb[0].mxu0
        %v1963 = vadd.f32 %v1916, %v1962
        %v1964 = vpop.f32.mrb[0].mxu0
        %v1965 = vpop.f32.mrb[0].mxu0
        %v1966 = vpop.f32.mrb[0].mxu0
        %1967 = vdwg.mxu0
        %v1968 = vadd.f32 %v1958, %v1251
        %v1969 = vadd.f32 %v1963, %v1252
        %v1970 = vpack.c.bf16 %v1969, %v1968
        %v1971 = vld [vmem:[#allocation9] sm:$0xf]
        %v1972 = vld [vmem:[#allocation9 + $0x4] sm:$0xf]
        %v1973 = vld [vmem:[#allocation9 + $0x8] sm:$0xf]
        %v1974 = vld [vmem:[#allocation9 + $0xc] sm:$0xf]
        %v1975 = vld [vmem:[#allocation9 + $0x10] sm:$0xf]
        %v1976 = vld [vmem:[#allocation9 + $0x14] sm:$0xf]
        %v1977 = vld [vmem:[#allocation9 + $0x18] sm:$0xf]
        %v1978 = vld [vmem:[#allocation9 + $0x1c] sm:$0xf]
        %v1979 = vld [vmem:[#allocation9 + $0x20] sm:$0xf]
        %v1980 = vld [vmem:[#allocation9 + $0x24] sm:$0xf]
        %v1981 = vld [vmem:[#allocation9 + $0x28] sm:$0xf]
        %v1982 = vld [vmem:[#allocation9 + $0x2c] sm:$0xf]
        %v1983 = vld [vmem:[#allocation9 + $0x30] sm:$0xf]
        %v1984 = vld [vmem:[#allocation9 + $0x34] sm:$0xf]
        %v1985 = vld [vmem:[#allocation9 + $0x38] sm:$0xf]
        %v1986 = vld [vmem:[#allocation9 + $0x3c] sm:$0xf]
        %v1987 = vld [vmem:[%s6] sm:$0x1]
        %v1989 = vlaneseq
        %v1990 = vshrl.u32 %v1989, 7
        %v1991 = vsub.s32 0, %v1990
        %v1992 = vrot.slane %v1987, %v1991
        %v2010 = vunpack.c.l.b16 %v1971
        %v2011 = vunpack.c.l.b16 %v1972
        %v2012 = vunpack.c.l.b16 %v1973
        %v2013 = vunpack.c.l.b16 %v1974
        %v2014 = vunpack.c.l.b16 %v1975
        %v2015 = vunpack.c.l.b16 %v1976
        %v2016 = vunpack.c.l.b16 %v1977
        %v2017 = vunpack.c.l.b16 %v1978
        %v2018 = vunpack.c.l.b16 %v1979
        %v2019 = vunpack.c.l.b16 %v1980
        %v2020 = vunpack.c.l.b16 %v1981
        %v2021 = vunpack.c.l.b16 %v1982
        %v2022 = vunpack.c.l.b16 %v1983
        %v2023 = vunpack.c.l.b16 %v1984
        %v2024 = vunpack.c.l.b16 %v1985
        %v2025 = vunpack.c.l.b16 %v1986
        %v2026 = vpack.c.b16 %v2011, %v2010
        %v2027 = vpack.c.b16 %v2013, %v2012
        %v2028 = vpack.c.b16 %v2015, %v2014
        %v2029 = vpack.c.b16 %v2017, %v2016
        %v2030 = vpack.c.b16 %v2019, %v2018
        %v2031 = vpack.c.b16 %v2021, %v2020
        %v2032 = vpack.c.b16 %v2023, %v2022
        %v2033 = vpack.c.b16 %v2025, %v2024
        %2042 = vmatprep.subr.bf16.mxu0 0
        %2043 = vmatpush1.bf16.msra.mxu0 %v2026
        %2044 = vmatprep.subr.bf16.mxu0 0
        %2045 = vmatpush1.bf16.msra.mxu0 %v2027
        %2046 = vmatprep.subr.bf16.mxu0 0
        %2047 = vmatpush1.bf16.msra.mxu0 %v2028
        %2048 = vmatprep.subr.bf16.mxu0 0
        %2049 = vmatpush1.bf16.msra.mxu0 %v2029
        %2050 = vmatprep.subr.bf16.mxu0 0
        %2051 = vmatpush1.bf16.msra.mxu0 %v2030
        %2052 = vmatprep.subr.bf16.mxu0 0
        %2053 = vmatpush1.bf16.msra.mxu0 %v2031
        %2054 = vmatprep.subr.bf16.mxu0 0
        %2055 = vmatpush1.bf16.msra.mxu0 %v2032
        %2056 = vmatprep.subr.bf16.mxu0 0
        %2057 = vmatpush1.bf16.msra.mxu0 %v2033
        %2058 = vmatprep.subr.bf16.mxu0 0
        %2059 = vmatpush1.bf16.msra.mxu0 0
        %2060 = vmatprep.subr.bf16.mxu0 0
        %2061 = vmatpush1.bf16.msra.mxu0 0
        %2062 = vmatprep.subr.bf16.mxu0 0
        %2063 = vmatpush1.bf16.msra.mxu0 0
        %2064 = vmatprep.subr.bf16.mxu0 0
        %2065 = vmatpush1.bf16.msra.mxu0 0
        %2066 = vmatprep.subr.bf16.mxu0 0
        %2067 = vmatpush1.bf16.msra.mxu0 0
        %2068 = vmatprep.subr.bf16.mxu0 0
        %2069 = vmatpush1.bf16.msra.mxu0 0
        %2070 = vmatprep.subr.bf16.mxu0 0
        %2071 = vmatpush1.bf16.msra.mxu0 0
        %2072 = vmatprep.subr.bf16.mxu0 0
        %2073 = vmatpush1.bf16.msra.mxu0 0
        %2074 = vmatprep.mubr.bf16.mxu0 0
        %2075 = vmatmul.mubr.bf16.gmra.mrb[0].mxu0 %v1970
        %v2076 = vpop.f32.mrb[0].mxu0
        %v2077 = vadd.f32 %v1992, %v2076
        %v2078 = vpop.f32.mrb[0].mxu0
        %v2079 = vpop.f32.mrb[0].mxu0
        %v2080 = vadd.f32 %v1992, %v2079
        %v2081 = vpop.f32.mrb[0].mxu0
        %2082 = vdwg.mxu0
        %v2083 = vmul.f32 %v2077, 1.442695
        %v2084 = vpow.pop %v2083
        %v2085 = vmul.f32 %v2080, 1.442695
        %v2086 = vpow.pop %v2085
        %v2087 = vadd.f32 %v2084, 1.0
        %v2088 = vadd.f32 %v2086, 1.0
        %v2089 = vrcp.pop %v2087
        %v2090 = vrcp.pop %v2088
        %v2091 = vmul.f32 %v2084, %v2089
        %v2092 = vmul.f32 %v2086, %v2090
        %vm2093 = vcmp.gt.f32.partialorder %v2077, 20.0
        %vm2094 = vcmp.gt.f32.partialorder %v2080, 20.0
        %v2095 = vsel %vm2093, 1.0, %v2091
        %v2096 = vsel %vm2094, 1.0, %v2092
        %v2097 = vlaneseq
        %v2098 = vand.u32 %v2097, 127
        %vm2099 = vcmp.lt.s32.totalorder %v2098, 4
        %v2100 = vsel %vm2099, %v2095, %v2084
        %v2101 = vsel %vm2099, %v2096, %v2086
        %v2102 = vpack.c.bf16 %v2101, %v2100
        %v2104 = vunpack.c.l.b16 %v2102
        %v2105 = vunpack.c.h.b16 %v2102
        %v2106 = vpack.c.b16 %v2104, %v2104
        %v2107 = vpack.c.b16 %v2105, %v2105
        %2110 = vst [vmem:[%s358] sm:$0xf] %v2106
        %2111 = vst [vmem:[%s358 + $0x4] sm:$0xf] %v2107
        %s2112 = sand.u32 %s202, 1
        %s2113 = scalar_lea.sflag [#allocation5], %s2112
        %s2114 = sand.u32 %s202, 1
        %s2115 = smul.addr %s2114, 8
        %s2116 = scalar_lea.vmem [#allocation11], %s2115
        // Predicated region
        $region65: #{tpu_custom_call.1} parent=47 // pred_check
          %p2117 = pneg %p212
        $region66: #{tpu_custom_call.1} parent=47 // pred_check_branch
          %2119 = sbr.rel (%p2117) target = $region68
        $region67: #{tpu_custom_call.1} parent=47 // pred_region
          %s2121 = ssub.s32 128, 128
          %2122 = vsyncadd %s2113, %s2121
          %s2123 = smul.addr %s31, 2
          %s2124 = smul.addr %s30, 2
          %s2125 = sadd.s32 %s2123, %s2124
          %s2126 = smul.addr %s2125, 64
          %s2127 = scalar_lea.hbm %s7, %s2126
          %s2128 = sshll.u32 %s2116, 4
          %s2129 = int_to_ptr.vmem [resolvable:$true] %s2128
          %2134 = dma.vmem_to_hbm [thread:$0]  %s2129, 128, %s2127, %s2113, 64, 64, 4
        $region68: #{tpu_custom_call.1} parent=47 // pred_fallthru
          _
      $region48: #{tpu_custom_call.1} parent=5 // pred_fallthru
        _
      %p2135 = scmp.le.s32.totalorder 2, %s21
      // Predicated region
      $region69: #{tpu_custom_call.1} parent=5 // pred_check
        %p2136 = pneg %p2135
      $region70: #{tpu_custom_call.1} parent=5 // pred_check_branch
        %2138 = sbr.rel (%p2136) target = $region72
      $region71: #{tpu_custom_call.1} parent=5 // pred_region
        %s2139 = ssub.s32 %s21, 2
        // Predicated region
        $region73: #{tpu_custom_call.1} parent=71 // pred_check
          %p2140 = pneg %p218
        $region74: #{tpu_custom_call.1} parent=71 // pred_check_branch
          %2142 = sbr.rel (%p2140) target = $region76
        $region75: #{tpu_custom_call.1} parent=71 // pred_region
          %s2143 = sand.u32 %s203, 1
          %s2144 = scalar_lea.sflag [#allocation5], %s2143
          %s2145 = sand.u32 %s203, 1
          %s2146 = smul.addr %s2145, 8
          %s2147 = scalar_lea.vmem [#allocation11], %s2146
          %2148 = dma.done %s2144, 128
        $region76: #{tpu_custom_call.1} parent=71 // pred_fallthru
          _
      $region72: #{tpu_custom_call.1} parent=5 // pred_fallthru
        _
    $region6: #{tpu_custom_call.1} parent=1 // loop_footer
      %s25 = sadd.s32 1, %s21
    $region7: #{tpu_custom_call.1} parent=1 // loop_footer_branch
      %20 = sbr.rel target = $region3
    $region8: #{tpu_custom_call.1} parent=1 // loop_exit
      _
    %2149 = vsyncpa [#allocation4], 1
    %s2150 = scalar_lea.sflag [#allocation4], 1
    %2151 = vsyncpa %s2150, 1
    %2152 = vsyncpa [#allocation7], 1
    %2153 = vsyncpa [#allocation10], 1
    %2154 = vsyncpa [#allocation5], 1
    %s2155 = scalar_lea.sflag [#allocation5], 1
    %2156 = vsyncpa %s2155, 1

</llo_original>
